<compile_context>
chip_gen: v6e
topology: v6e:2x2x1
jax: 0.10.0
libtpu: 0.0.40
codegen_flags: <defaults>
</compile_context>

<pallas_src>
import jax
import jax.numpy as jnp
import numpy as np
from jax.experimental import pallas as pl
from jax.experimental.pallas import tpu as pltpu

# Problem sizes (small, consistent with the module's forward).
BATCH = 8
INP_SIZE = 32
HIDDEN = 32
NUM_LSTMS = 4

_NH = NUM_LSTMS * HIDDEN
assert _NH % 128 == 0, "gate slabs must be lane-aligned: N*H must be a multiple of 128"
assert 2 * HIDDEN + NUM_LSTMS <= _NH, "packed output layout needs 2*H + N <= N*H lanes"


def _gate_major_perm(hidden, num_lstms):
    """perm[new] = old, with new = gate*(N*H) + n*H + h, old = n*4H + gate*H + h."""
    return np.arange(4 * num_lstms * hidden).reshape(
        num_lstms, 4, hidden).transpose(1, 0, 2).reshape(-1)


def prepare_group_lstm_params(wi, bi, wh, bh, wsc, bsc):
    """One-time layout work (zero per-step cost).

    Inputs are original-layout parameters:
      wi (I, 4NH), bi (1, 4NH), wh (H, 4NH), bh (1, 4NH),
      wsc (N, 8H) group scorer weights, bsc (1, N) group scorer bias.
    """
    I = wi.shape[0]
    H, N = HIDDEN, NUM_LSTMS
    G = 4 * N * H
    NH = N * H
    perm = _gate_major_perm(H, N)

    # Gate-major projection weights/biases.  No zero-padded block-diagonal
    # fusion: two dense matmuls halve weight bytes & MXU MACs vs the [x|h] form.
    wi_p = jnp.asarray(wi[:, perm], jnp.bfloat16)           # (I, G)
    wh_p = jnp.asarray(wh[:, perm], jnp.bfloat16)           # (H, G)
    bi_p = jnp.asarray(bi[:, perm], jnp.float32)            # (1, G)
    bh_p = jnp.asarray(bh[:, perm], jnp.float32)            # (1, G)

    # Block-diagonal scorer halves: logits = relu(ih) @ wsc_i + relu(hh) @ wsc_h.
    eye_n = jnp.eye(N, dtype=jnp.float32)
    wsc_i = (wsc[:, :4 * H, None] * eye_n[:, None, :]).reshape(G, N)[perm]
    wsc_h = (wsc[:, 4 * H:, None] * eye_n[:, None, :]).reshape(G, N)[perm]
    wsc_i = wsc_i.astype(jnp.bfloat16)                      # (G, N)
    wsc_h = wsc_h.astype(jnp.bfloat16)                      # (G, N)

    # Combined score expansion + placement matrix (exact 0/1, kept f32):
    #   cols [0, NH):    score[n] replicated over lanes [n*H, (n+1)*H)
    #   cols [NH, 2NH):  score[n] placed at lane 2*H + n  (packed-output slot)
    expand = jnp.kron(eye_n, jnp.ones((1, H), jnp.float32))             # (N, NH)
    place = jnp.zeros((N, NH), jnp.float32)
    place = place.at[jnp.arange(N), 2 * H + jnp.arange(N)].set(1.0)     # (N, NH)
    exp_place = jnp.concatenate([expand, place], axis=-1)               # (N, 2NH)

    # Group-tiling matrix (exact 0/1, f32): v (B,H) @ tile_c -> (B, NH) with v
    # replicated into every H-wide group chunk.  Used for the in-kernel c
    # broadcast and for placing the reduced h/c sums lane-densely in the output.
    tile_c = jnp.kron(jnp.ones((1, N), jnp.float32),
                      jnp.eye(H, dtype=jnp.float32))                    # (H, NH)

    return (wi_p, bi_p, wh_p, bh_p, wsc_i, wsc_h,
            jnp.asarray(bsc, jnp.float32), exp_place, tile_c)


def group_lstm_cell_kernel(x_ref, h_ref, c_ref,
                           wi_ref, bi_ref, wh_ref, bh_ref,
                           wsci_ref, wsch_ref, bsc_ref,
                           expl_ref, tilec_ref, out_ref):
    H, N = HIDDEN, NUM_LSTMS
    NH = N * H                         # 128 -> one full vreg lane width
    B = x_ref.shape[0]

    # --- projections: two dense bf16 MXU matmuls, f32 accumulation -----------
    x_b = x_ref[...].astype(jnp.bfloat16)
    h_b = h_ref[...].astype(jnp.bfloat16)
    ih = jnp.dot(x_b, wi_ref[...], preferred_element_type=jnp.float32) + bi_ref[...]
    hh = jnp.dot(h_b, wh_ref[...], preferred_element_type=jnp.float32) + bh_ref[...]

    # --- group scorer: relu -> block-diagonal matmuls -> softmax over N ------
    ri = jnp.maximum(ih, 0.0).astype(jnp.bfloat16)
    rh = jnp.maximum(hh, 0.0).astype(jnp.bfloat16)
    logits = (jnp.dot(ri, wsci_ref[...], preferred_element_type=jnp.float32)
              + jnp.dot(rh, wsch_ref[...], preferred_element_type=jnp.float32)
              + bsc_ref[...])                                           # (B, N)
    m = jnp.max(logits, axis=-1, keepdims=True)
    e = jnp.exp(logits - m)
    score = e / jnp.sum(e, axis=-1, keepdims=True)                      # (B, N)

    # One tiny exact f32 matmul yields both the per-lane replicated score (for
    # the weighted group sum) and the score placed at output lanes [2H, 2H+N).
    sp = jnp.dot(score, expl_ref[...], preferred_element_type=jnp.float32)  # (B, 2NH)
    score_rep = sp[:, :NH]
    score_placed = sp[:, NH:]

    # --- gates: gate-major layout, every slab is a full lane-dense vreg ------
    pre = ih + hh                                                       # (B, 4NH)

    def sig(v):     # sigmoid via EUP tanh: 0.5*tanh(0.5*x) + 0.5
        return 0.5 * jnp.tanh(0.5 * v) + 0.5

    i_t = sig(pre[:, 0 * NH:1 * NH])
    f_t = sig(pre[:, 1 * NH:2 * NH])
    o_t = sig(pre[:, 2 * NH:3 * NH])
    g_t = jnp.tanh(pre[:, 3 * NH:4 * NH])

    # Broadcast c across the N groups with an exact 0/1 f32 MXU matmul (no
    # wrapper-side jnp.tile / extra HBM round trip).
    c_rep = jnp.dot(c_ref[...], tilec_ref[...], preferred_element_type=jnp.float32)

    c_all = c_rep * f_t + i_t * g_t                                     # (B, NH)
    h_all = o_t * jnp.tanh(c_all)                                       # (B, NH)

    w_h = h_all * score_rep
    w_c = c_all * score_rep

    # Reduce over the N groups: static H-wide lane slices, N-1 VPU adds.
    def group_sum(v):
        s = v[:, 0:H]
        for n in range(1, N):
            s = s + v[:, n * H:(n + 1) * H]
        return s

    h_sum = group_sum(w_h)                                              # (B, H)
    c_sum = group_sum(w_c)                                              # (B, H)

    # Lane-dense packed output [h_out | c_out | score | 0] built with iota-masked
    # selects (no unaligned lane concatenates).  tile_c replicates the reduced
    # sums across all group chunks; the selects keep lanes [0,H) / [H,2H).
    h_rep = jnp.dot(h_sum, tilec_ref[...], preferred_element_type=jnp.float32)
    c_rep_out = jnp.dot(c_sum, tilec_ref[...], preferred_element_type=jnp.float32)
    lane = jax.lax.broadcasted_iota(jnp.int32, (B, NH), 1)
    out_ref[...] = jnp.where(lane < H, h_rep,
                             jnp.where(lane < 2 * H, c_rep_out, score_placed))


def _full(shape):
    return pl.BlockSpec(shape, lambda i: tuple(0 for _ in shape))


@jax.jit
def group_lstm_cell(x, h, c, wi_p, bi_p, wh_p, bh_p, wsc_i, wsc_h, bsc,
                    exp_place, tile_c):
    B, I = x.shape
    H, N = HIDDEN, NUM_LSTMS
    NH = N * H
    G = 4 * NH

    cost = pl.CostEstimate(
        flops=2 * B * (I * G + H * G + 2 * G * N + 2 * N * NH + 3 * H * NH),
        transcendentals=B * (5 * NH + N),
        bytes_accessed=(2 * (wi_p.size + wh_p.size + wsc_i.size + wsc_h.size)
                        + 4 * (bi_p.size + bh_p.size + bsc.size
                               + exp_place.size + tile_c.size
                               + x.size + h.size + c.size + B * NH)))

    packed = pl.pallas_call(
        group_lstm_cell_kernel,
        out_shape=jax.ShapeDtypeStruct((B, NH), jnp.float32),
        grid=(1,),
        in_specs=[
            _full((B, I)),          # x
            _full((B, H)),          # h
            _full((B, H)),          # c
            _full((I, G)),          # wi_p (bf16, gate-major)
            _full((1, G)),          # bi_p
            _full((H, G)),          # wh_p (bf16, gate-major)
            _full((1, G)),          # bh_p
            _full((G, N)),          # wsc_i (bf16, block-diag scorer half)
            _full((G, N)),          # wsc_h (bf16, block-diag scorer half)
            _full((1, N)),          # bsc
            _full((N, 2 * NH)),     # exp_place (score expand + placement)
            _full((H, NH)),         # tile_c (group tiling matrix)
        ],
        out_specs=_full((B, NH)),
        compiler_params=pltpu.CompilerParams(
            dimension_semantics=("arbitrary",)),
        cost_estimate=cost,
    )(x, h, c, wi_p, bi_p, wh_p, bh_p, wsc_i, wsc_h, bsc, exp_place, tile_c)

    h_out = packed[:, :H]
    c_out = packed[:, H:2 * H]
    score = packed[:, 2 * H:2 * H + N][:, :, None]   # (B, N, 1) like PyTorch
    return h_out, c_out, score


def reference_forward(x, h, c, wi, bi, wh, bh, wsc, bsc):
    """Pure-JAX f32 reference mirroring the PyTorch forward (original layout)."""
    B = x.shape[0]
    H, N = HIDDEN, NUM_LSTMS
    ih = (x @ wi + bi).reshape(B, N, 4 * H)
    hh = (h @ wh + bh).reshape(B, N, 4 * H)
    cat = jnp.concatenate([ih, hh], axis=-1)                 # (B, N, 8H)
    logits = jnp.einsum('bnd,nd->bn', jnp.maximum(cat, 0.0), wsc) + bsc[0]
    score = jax.nn.softmax(logits, axis=1)[..., None]        # (B, N, 1)
    pre = ih + hh
    gates = jax.nn.sigmoid(pre[..., :3 * H])
    g_t = jnp.tanh(pre[..., 3 * H:])
    i_t = gates[..., :H]
    f_t = gates[..., H:2 * H]
    o_t = gates[..., 2 * H:3 * H]
    c_t = c[:, None, :] * f_t + i_t * g_t
    h_t = o_t * jnp.tanh(c_t)
    h_out = (h_t * score).sum(axis=1)
    c_out = (c_t * score).sum(axis=1)
    return h_out, c_out, score


if __name__ == "__main__":
    key = jax.random.PRNGKey(0)
    ks = jax.random.split(key, 10)

    B, I, H, N = BATCH, INP_SIZE, HIDDEN, NUM_LSTMS
    G = 4 * N * H

    # Deterministic synthetic parameters (PyTorch-style uniform bounds),
    # stored in the original (unfused, group-major) layout.
    b_i = 1.0 / np.sqrt(I)
    b_h = 1.0 / np.sqrt(H)
    b_s = 1.0 / np.sqrt(8 * H)
    wi = jax.random.uniform(ks[0], (I, G), jnp.float32, -b_i, b_i)
    bi = jax.random.uniform(ks[1], (1, G), jnp.float32, -b_i, b_i)
    wh = jax.random.uniform(ks[2], (H, G), jnp.float32, -b_h, b_h)
    bh = jax.random.uniform(ks[3], (1, G), jnp.float32, -b_h, b_h)
    wsc = jax.random.uniform(ks[4], (N, 8 * H), jnp.float32, -b_s, b_s)
    bsc = jax.random.uniform(ks[5], (1, N), jnp.float32, -b_s, b_s)

    # Inputs.
    x = jax.random.normal(ks[6], (B, I), jnp.float32)
    h0 = jax.random.normal(ks[7], (B, H), jnp.float32)
    c0 = jax.random.normal(ks[8], (B, H), jnp.float32)

    # One-time parameter permutation / fusion (zero per-step cost).
    fused = prepare_group_lstm_params(wi, bi, wh, bh, wsc, bsc)

    h_out, c_out, score = group_lstm_cell(x, h0, c0, *fused)
    jax.block_until_ready((h_out, c_out, score))

    h_ref, c_ref, score_ref = reference_forward(x, h0, c0, wi, bi, wh, bh, wsc, bsc)
    # bf16 matmul weights -> relaxed tolerance (expected per the perf review).
    np.testing.assert_allclose(np.asarray(h_out), np.asarray(h_ref), atol=2e-2, rtol=2e-2)
    np.testing.assert_allclose(np.asarray(c_out), np.asarray(c_ref), atol=2e-2, rtol=2e-2)
    np.testing.assert_allclose(np.asarray(score), np.asarray(score_ref), atol=2e-2, rtol=2e-2)

    assert h_out.shape == (B, H) and c_out.shape == (B, H) and score.shape == (B, N, 1)
    print("KERNEL_OK")
</pallas_src>

<mosaic_0001>
module attributes {stable_mosaic.version = 11 : i64} {
  func.func @group_lstm_cell_kernel(%arg0: i32, %arg1: memref<8x32xf32, #tpu.memory_space<vmem>>, %arg2: memref<8x32xf32, #tpu.memory_space<vmem>>, %arg3: memref<8x32xf32, #tpu.memory_space<vmem>>, %arg4: memref<32x512xbf16, #tpu.memory_space<vmem>>, %arg5: memref<1x512xf32, #tpu.memory_space<vmem>>, %arg6: memref<32x512xbf16, #tpu.memory_space<vmem>>, %arg7: memref<1x512xf32, #tpu.memory_space<vmem>>, %arg8: memref<512x4xbf16, #tpu.memory_space<vmem>>, %arg9: memref<512x4xbf16, #tpu.memory_space<vmem>>, %arg10: memref<1x4xf32, #tpu.memory_space<vmem>>, %arg11: memref<4x256xf32, #tpu.memory_space<vmem>>, %arg12: memref<32x128xf32, #tpu.memory_space<vmem>>, %arg13: memref<8x128xf32, #tpu.memory_space<vmem>>) attributes {dimension_semantics = [#tpu.dimension_semantics<arbitrary>], iteration_bounds = array<i64: 1>, scalar_prefetch = 0 : i64, scratch_operands = 0 : i64, tpu.core_type = #tpu.core_type<tc>, window_params = [{pipeline_mode = #tpu.pipeline_mode<synchronous>, transform_indices = @transform_0, window_bounds = array<i64: 8, 32>}, {pipeline_mode = #tpu.pipeline_mode<synchronous>, transform_indices = @transform_1, window_bounds = array<i64: 8, 32>}, {pipeline_mode = #tpu.pipeline_mode<synchronous>, transform_indices = @transform_2, window_bounds = array<i64: 8, 32>}, {pipeline_mode = #tpu.pipeline_mode<synchronous>, transform_indices = @transform_3, window_bounds = array<i64: 32, 512>}, {pipeline_mode = #tpu.pipeline_mode<synchronous>, transform_indices = @transform_4, window_bounds = array<i64: 1, 512>}, {pipeline_mode = #tpu.pipeline_mode<synchronous>, transform_indices = @transform_5, window_bounds = array<i64: 32, 512>}, {pipeline_mode = #tpu.pipeline_mode<synchronous>, transform_indices = @transform_6, window_bounds = array<i64: 1, 512>}, {pipeline_mode = #tpu.pipeline_mode<synchronous>, transform_indices = @transform_7, window_bounds = array<i64: 512, 4>}, {pipeline_mode = #tpu.pipeline_mode<synchronous>, transform_indices = @transform_8, window_bounds = array<i64: 512, 4>}, {pipeline_mode = #tpu.pipeline_mode<synchronous>, transform_indices = @transform_9, window_bounds = array<i64: 1, 4>}, {pipeline_mode = #tpu.pipeline_mode<synchronous>, transform_indices = @transform_10, window_bounds = array<i64: 4, 256>}, {pipeline_mode = #tpu.pipeline_mode<synchronous>, transform_indices = @transform_11, window_bounds = array<i64: 32, 128>}, {pipeline_mode = #tpu.pipeline_mode<synchronous>, transform_indices = @transform_12, window_bounds = array<i64: 8, 128>}]} {
    %c0 = arith.constant 0 : index
    %c0_0 = arith.constant 0 : index
    %0 = vector.load %arg1[%c0, %c0_0] : memref<8x32xf32, #tpu.memory_space<vmem>>, vector<8x32xf32>
    %1 = arith.truncf %0 : vector<8x32xf32> to vector<8x32xbf16>
    %c0_1 = arith.constant 0 : index
    %c0_2 = arith.constant 0 : index
    %2 = vector.load %arg2[%c0_1, %c0_2] : memref<8x32xf32, #tpu.memory_space<vmem>>, vector<8x32xf32>
    %3 = arith.truncf %2 : vector<8x32xf32> to vector<8x32xbf16>
    %c0_3 = arith.constant 0 : index
    %c0_4 = arith.constant 0 : index
    %4 = vector.load %arg4[%c0_3, %c0_4] : memref<32x512xbf16, #tpu.memory_space<vmem>>, vector<32x512xbf16>
    %cst = arith.constant dense<0.000000e+00> : vector<8x512xf32>
    %5 = tpu.matmul %1, %4, %cst {dimension_numbers = #tpu.dot_dimension_numbers<[1], [0], [0], [1], [0, 0, 1, 1], [], []>} : vector<8x32xbf16>, vector<32x512xbf16>, vector<8x512xf32> -> vector<8x512xf32>
    %c0_5 = arith.constant 0 : index
    %c0_6 = arith.constant 0 : index
    %6 = vector.load %arg5[%c0_5, %c0_6] : memref<1x512xf32, #tpu.memory_space<vmem>>, vector<1x512xf32>
    %7 = vector.broadcast %6 : vector<1x512xf32> to vector<8x512xf32>
    %8 = arith.addf %5, %7 : vector<8x512xf32>
    %c0_7 = arith.constant 0 : index
    %c0_8 = arith.constant 0 : index
    %9 = vector.load %arg6[%c0_7, %c0_8] : memref<32x512xbf16, #tpu.memory_space<vmem>>, vector<32x512xbf16>
    %cst_9 = arith.constant dense<0.000000e+00> : vector<8x512xf32>
    %10 = tpu.matmul %3, %9, %cst_9 {dimension_numbers = #tpu.dot_dimension_numbers<[1], [0], [0], [1], [0, 0, 1, 1], [], []>} : vector<8x32xbf16>, vector<32x512xbf16>, vector<8x512xf32> -> vector<8x512xf32>
    %c0_10 = arith.constant 0 : index
    %c0_11 = arith.constant 0 : index
    %11 = vector.load %arg7[%c0_10, %c0_11] : memref<1x512xf32, #tpu.memory_space<vmem>>, vector<1x512xf32>
    %12 = vector.broadcast %11 : vector<1x512xf32> to vector<8x512xf32>
    %13 = arith.addf %10, %12 : vector<8x512xf32>
    %cst_12 = arith.constant 0.000000e+00 : f32
    %14 = vector.broadcast %cst_12 : f32 to vector<8x512xf32>
    %15 = arith.maximumf %8, %14 : vector<8x512xf32>
    %16 = arith.truncf %15 : vector<8x512xf32> to vector<8x512xbf16>
    %cst_13 = arith.constant 0.000000e+00 : f32
    %17 = vector.broadcast %cst_13 : f32 to vector<8x512xf32>
    %18 = arith.maximumf %13, %17 : vector<8x512xf32>
    %19 = arith.truncf %18 : vector<8x512xf32> to vector<8x512xbf16>
    %c0_14 = arith.constant 0 : index
    %c0_15 = arith.constant 0 : index
    %20 = vector.load %arg8[%c0_14, %c0_15] : memref<512x4xbf16, #tpu.memory_space<vmem>>, vector<512x4xbf16>
    %cst_16 = arith.constant dense<0.000000e+00> : vector<8x4xf32>
    %21 = tpu.matmul %16, %20, %cst_16 {dimension_numbers = #tpu.dot_dimension_numbers<[1], [0], [0], [1], [0, 0, 1, 1], [], []>} : vector<8x512xbf16>, vector<512x4xbf16>, vector<8x4xf32> -> vector<8x4xf32>
    %c0_17 = arith.constant 0 : index
    %c0_18 = arith.constant 0 : index
    %22 = vector.load %arg9[%c0_17, %c0_18] : memref<512x4xbf16, #tpu.memory_space<vmem>>, vector<512x4xbf16>
    %cst_19 = arith.constant dense<0.000000e+00> : vector<8x4xf32>
    %23 = tpu.matmul %19, %22, %cst_19 {dimension_numbers = #tpu.dot_dimension_numbers<[1], [0], [0], [1], [0, 0, 1, 1], [], []>} : vector<8x512xbf16>, vector<512x4xbf16>, vector<8x4xf32> -> vector<8x4xf32>
    %24 = arith.addf %21, %23 : vector<8x4xf32>
    %c0_20 = arith.constant 0 : index
    %c0_21 = arith.constant 0 : index
    %25 = vector.load %arg10[%c0_20, %c0_21] : memref<1x4xf32, #tpu.memory_space<vmem>>, vector<1x4xf32>
    %26 = vector.broadcast %25 : vector<1x4xf32> to vector<8x4xf32>
    %27 = arith.addf %24, %26 : vector<8x4xf32>
    %cst_22 = arith.constant dense<0xFF800000> : vector<8xf32>
    %28 = vector.multi_reduction <maximumf>, %27, %cst_22 [1] : vector<8x4xf32> to vector<8xf32>
    %29 = vector.shape_cast %28 : vector<8xf32> to vector<8x1xf32>
    %30 = vector.broadcast %29 : vector<8x1xf32> to vector<8x4xf32>
    %31 = arith.subf %27, %30 : vector<8x4xf32>
    %32 = math.exp %31 : vector<8x4xf32>
    %cst_23 = arith.constant dense<0.000000e+00> : vector<8xf32>
    %33 = vector.multi_reduction <add>, %32, %cst_23 [1] : vector<8x4xf32> to vector<8xf32>
    %34 = vector.shape_cast %33 : vector<8xf32> to vector<8x1xf32>
    %35 = vector.broadcast %34 : vector<8x1xf32> to vector<8x4xf32>
    %36 = arith.divf %32, %35 : vector<8x4xf32>
    %c0_24 = arith.constant 0 : index
    %c0_25 = arith.constant 0 : index
    %37 = vector.load %arg11[%c0_24, %c0_25] : memref<4x256xf32, #tpu.memory_space<vmem>>, vector<4x256xf32>
    %cst_26 = arith.constant dense<0.000000e+00> : vector<8x256xf32>
    %38 = tpu.matmul %36, %37, %cst_26 {dimension_numbers = #tpu.dot_dimension_numbers<[1], [0], [0], [1], [0, 0, 1, 1], [], []>} : vector<8x4xf32>, vector<4x256xf32>, vector<8x256xf32> -> vector<8x256xf32>
    %39 = vector.extract_strided_slice %38 {offsets = [0, 0], sizes = [8, 128], strides = [1, 1]} : vector<8x256xf32> to vector<8x128xf32>
    %40 = vector.extract_strided_slice %38 {offsets = [0, 128], sizes = [8, 128], strides = [1, 1]} : vector<8x256xf32> to vector<8x128xf32>
    %41 = arith.addf %8, %13 : vector<8x512xf32>
    %42 = vector.extract_strided_slice %41 {offsets = [0, 0], sizes = [8, 128], strides = [1, 1]} : vector<8x512xf32> to vector<8x128xf32>
    %cst_27 = arith.constant 5.000000e-01 : f32
    %43 = vector.broadcast %cst_27 : f32 to vector<8x128xf32>
    %44 = arith.mulf %43, %42 : vector<8x128xf32>
    %45 = math.tanh %44 : vector<8x128xf32>
    %cst_28 = arith.constant 5.000000e-01 : f32
    %46 = vector.broadcast %cst_28 : f32 to vector<8x128xf32>
    %47 = arith.mulf %46, %45 : vector<8x128xf32>
    %cst_29 = arith.constant 5.000000e-01 : f32
    %48 = vector.broadcast %cst_29 : f32 to vector<8x128xf32>
    %49 = arith.addf %47, %48 : vector<8x128xf32>
    %50 = vector.extract_strided_slice %41 {offsets = [0, 128], sizes = [8, 128], strides = [1, 1]} : vector<8x512xf32> to vector<8x128xf32>
    %cst_30 = arith.constant 5.000000e-01 : f32
    %51 = vector.broadcast %cst_30 : f32 to vector<8x128xf32>
    %52 = arith.mulf %51, %50 : vector<8x128xf32>
    %53 = math.tanh %52 : vector<8x128xf32>
    %cst_31 = arith.constant 5.000000e-01 : f32
    %54 = vector.broadcast %cst_31 : f32 to vector<8x128xf32>
    %55 = arith.mulf %54, %53 : vector<8x128xf32>
    %cst_32 = arith.constant 5.000000e-01 : f32
    %56 = vector.broadcast %cst_32 : f32 to vector<8x128xf32>
    %57 = arith.addf %55, %56 : vector<8x128xf32>
    %58 = vector.extract_strided_slice %41 {offsets = [0, 256], sizes = [8, 128], strides = [1, 1]} : vector<8x512xf32> to vector<8x128xf32>
    %cst_33 = arith.constant 5.000000e-01 : f32
    %59 = vector.broadcast %cst_33 : f32 to vector<8x128xf32>
    %60 = arith.mulf %59, %58 : vector<8x128xf32>
    %61 = math.tanh %60 : vector<8x128xf32>
    %cst_34 = arith.constant 5.000000e-01 : f32
    %62 = vector.broadcast %cst_34 : f32 to vector<8x128xf32>
    %63 = arith.mulf %62, %61 : vector<8x128xf32>
    %cst_35 = arith.constant 5.000000e-01 : f32
    %64 = vector.broadcast %cst_35 : f32 to vector<8x128xf32>
    %65 = arith.addf %63, %64 : vector<8x128xf32>
    %66 = vector.extract_strided_slice %41 {offsets = [0, 384], sizes = [8, 128], strides = [1, 1]} : vector<8x512xf32> to vector<8x128xf32>
    %67 = math.tanh %66 : vector<8x128xf32>
    %c0_36 = arith.constant 0 : index
    %c0_37 = arith.constant 0 : index
    %68 = vector.load %arg3[%c0_36, %c0_37] : memref<8x32xf32, #tpu.memory_space<vmem>>, vector<8x32xf32>
    %c0_38 = arith.constant 0 : index
    %c0_39 = arith.constant 0 : index
    %69 = vector.load %arg12[%c0_38, %c0_39] : memref<32x128xf32, #tpu.memory_space<vmem>>, vector<32x128xf32>
    %cst_40 = arith.constant dense<0.000000e+00> : vector<8x128xf32>
    %70 = tpu.matmul %68, %69, %cst_40 {dimension_numbers = #tpu.dot_dimension_numbers<[1], [0], [0], [1], [0, 0, 1, 1], [], []>} : vector<8x32xf32>, vector<32x128xf32>, vector<8x128xf32> -> vector<8x128xf32>
    %71 = arith.mulf %70, %57 : vector<8x128xf32>
    %72 = arith.mulf %49, %67 : vector<8x128xf32>
    %73 = arith.addf %71, %72 : vector<8x128xf32>
    %74 = math.tanh %73 : vector<8x128xf32>
    %75 = arith.mulf %65, %74 : vector<8x128xf32>
    %76 = arith.mulf %75, %39 : vector<8x128xf32>
    %77 = arith.mulf %73, %39 : vector<8x128xf32>
    %78 = vector.extract_strided_slice %76 {offsets = [0, 0], sizes = [8, 32], strides = [1, 1]} : vector<8x128xf32> to vector<8x32xf32>
    %79 = vector.extract_strided_slice %76 {offsets = [0, 32], sizes = [8, 32], strides = [1, 1]} : vector<8x128xf32> to vector<8x32xf32>
    %80 = arith.addf %78, %79 : vector<8x32xf32>
    %81 = vector.extract_strided_slice %76 {offsets = [0, 64], sizes = [8, 32], strides = [1, 1]} : vector<8x128xf32> to vector<8x32xf32>
    %82 = arith.addf %80, %81 : vector<8x32xf32>
    %83 = vector.extract_strided_slice %76 {offsets = [0, 96], sizes = [8, 32], strides = [1, 1]} : vector<8x128xf32> to vector<8x32xf32>
    %84 = arith.addf %82, %83 : vector<8x32xf32>
    %85 = vector.extract_strided_slice %77 {offsets = [0, 0], sizes = [8, 32], strides = [1, 1]} : vector<8x128xf32> to vector<8x32xf32>
    %86 = vector.extract_strided_slice %77 {offsets = [0, 32], sizes = [8, 32], strides = [1, 1]} : vector<8x128xf32> to vector<8x32xf32>
    %87 = arith.addf %85, %86 : vector<8x32xf32>
    %88 = vector.extract_strided_slice %77 {offsets = [0, 64], sizes = [8, 32], strides = [1, 1]} : vector<8x128xf32> to vector<8x32xf32>
    %89 = arith.addf %87, %88 : vector<8x32xf32>
    %90 = vector.extract_strided_slice %77 {offsets = [0, 96], sizes = [8, 32], strides = [1, 1]} : vector<8x128xf32> to vector<8x32xf32>
    %91 = arith.addf %89, %90 : vector<8x32xf32>
    %c0_41 = arith.constant 0 : index
    %c0_42 = arith.constant 0 : index
    %92 = vector.load %arg12[%c0_41, %c0_42] : memref<32x128xf32, #tpu.memory_space<vmem>>, vector<32x128xf32>
    %cst_43 = arith.constant dense<0.000000e+00> : vector<8x128xf32>
    %93 = tpu.matmul %84, %92, %cst_43 {dimension_numbers = #tpu.dot_dimension_numbers<[1], [0], [0], [1], [0, 0, 1, 1], [], []>} : vector<8x32xf32>, vector<32x128xf32>, vector<8x128xf32> -> vector<8x128xf32>
    %c0_44 = arith.constant 0 : index
    %c0_45 = arith.constant 0 : index
    %94 = vector.load %arg12[%c0_44, %c0_45] : memref<32x128xf32, #tpu.memory_space<vmem>>, vector<32x128xf32>
    %cst_46 = arith.constant dense<0.000000e+00> : vector<8x128xf32>
    %95 = tpu.matmul %91, %94, %cst_46 {dimension_numbers = #tpu.dot_dimension_numbers<[1], [0], [0], [1], [0, 0, 1, 1], [], []>} : vector<8x32xf32>, vector<32x128xf32>, vector<8x128xf32> -> vector<8x128xf32>
    %96 = tpu.iota {dimensions = array<i32: 1>} : vector<8x128xi32>
    %c32_i32 = arith.constant 32 : i32
    %97 = vector.broadcast %c32_i32 : i32 to vector<8x128xi32>
    %98 = arith.cmpi slt, %96, %97 : vector<8x128xi32>
    %c64_i32 = arith.constant 64 : i32
    %99 = vector.broadcast %c64_i32 : i32 to vector<8x128xi32>
    %100 = arith.cmpi slt, %96, %99 : vector<8x128xi32>
    %101 = arith.select %100, %95, %40 : vector<8x128xi1>, vector<8x128xf32>
    %102 = arith.select %98, %93, %101 : vector<8x128xi1>, vector<8x128xf32>
    %c0_47 = arith.constant 0 : index
    %c0_48 = arith.constant 0 : index
    %103 = vector.load %arg13[%c0_47, %c0_48] : memref<8x128xf32, #tpu.memory_space<vmem>>, vector<8x128xf32>
    tpu.vector_store %arg13[%c0_47, %c0_48], %102 {strides = array<i32>} : memref<8x128xf32, #tpu.memory_space<vmem>>, vector<8x128xf32>,
    return
  }
  func.func @transform_0(%arg0: i32) -> (i32, i32) {
    %c0_i32 = arith.constant 0 : i32
    %c0_i32_0 = arith.constant 0 : i32
    %c0_i32_1 = arith.constant 0 : i32
    return %c0_i32, %c0_i32_0 : i32, i32
  }
  func.func @transform_1(%arg0: i32) -> (i32, i32) {
    %c0_i32 = arith.constant 0 : i32
    %c0_i32_0 = arith.constant 0 : i32
    %c0_i32_1 = arith.constant 0 : i32
    return %c0_i32, %c0_i32_0 : i32, i32
  }
  func.func @transform_2(%arg0: i32) -> (i32, i32) {
    %c0_i32 = arith.constant 0 : i32
    %c0_i32_0 = arith.constant 0 : i32
    %c0_i32_1 = arith.constant 0 : i32
    return %c0_i32, %c0_i32_0 : i32, i32
  }
  func.func @transform_3(%arg0: i32) -> (i32, i32) {
    %c0_i32 = arith.constant 0 : i32
    %c0_i32_0 = arith.constant 0 : i32
    %c0_i32_1 = arith.constant 0 : i32
    return %c0_i32, %c0_i32_0 : i32, i32
  }
  func.func @transform_4(%arg0: i32) -> (i32, i32) {
    %c0_i32 = arith.constant 0 : i32
    %c0_i32_0 = arith.constant 0 : i32
    %c0_i32_1 = arith.constant 0 : i32
    return %c0_i32, %c0_i32_0 : i32, i32
  }
  func.func @transform_5(%arg0: i32) -> (i32, i32) {
    %c0_i32 = arith.constant 0 : i32
    %c0_i32_0 = arith.constant 0 : i32
    %c0_i32_1 = arith.constant 0 : i32
    return %c0_i32, %c0_i32_0 : i32, i32
  }
  func.func @transform_6(%arg0: i32) -> (i32, i32) {
    %c0_i32 = arith.constant 0 : i32
    %c0_i32_0 = arith.constant 0 : i32
    %c0_i32_1 = arith.constant 0 : i32
    return %c0_i32, %c0_i32_0 : i32, i32
  }
  func.func @transform_7(%arg0: i32) -> (i32, i32) {
    %c0_i32 = arith.constant 0 : i32
    %c0_i32_0 = arith.constant 0 : i32
    %c0_i32_1 = arith.constant 0 : i32
    return %c0_i32, %c0_i32_0 : i32, i32
  }
  func.func @transform_8(%arg0: i32) -> (i32, i32) {
    %c0_i32 = arith.constant 0 : i32
    %c0_i32_0 = arith.constant 0 : i32
    %c0_i32_1 = arith.constant 0 : i32
    return %c0_i32, %c0_i32_0 : i32, i32
  }
  func.func @transform_9(%arg0: i32) -> (i32, i32) {
    %c0_i32 = arith.constant 0 : i32
    %c0_i32_0 = arith.constant 0 : i32
    %c0_i32_1 = arith.constant 0 : i32
    return %c0_i32, %c0_i32_0 : i32, i32
  }
  func.func @transform_10(%arg0: i32) -> (i32, i32) {
    %c0_i32 = arith.constant 0 : i32
    %c0_i32_0 = arith.constant 0 : i32
    %c0_i32_1 = arith.constant 0 : i32
    return %c0_i32, %c0_i32_0 : i32, i32
  }
  func.func @transform_11(%arg0: i32) -> (i32, i32) {
    %c0_i32 = arith.constant 0 : i32
    %c0_i32_0 = arith.constant 0 : i32
    %c0_i32_1 = arith.constant 0 : i32
    return %c0_i32, %c0_i32_0 : i32, i32
  }
  func.func @transform_12(%arg0: i32) -> (i32, i32) {
    %c0_i32 = arith.constant 0 : i32
    %c0_i32_0 = arith.constant 0 : i32
    %c0_i32_1 = arith.constant 0 : i32
    return %c0_i32, %c0_i32_0 : i32, i32
  }
}

</mosaic_0001>

<llo_original>
// kernel: group_lstm_cell.1
$region0: #{group_lstm_cell.1}
  #allocation0 [shape = 'u32[]', space=smem, size = 0x4, offset = 0x4, fixed_abs, tag = 'smem constant byte address 0x4 - core index']
  #allocation1 [shape = 'u32[144,128]{1,0:T(1,128)}', space=vmem, size = 0x12000, scoped, tag = 'internal scratch']
  %s0 = inlined_call_operand.vmem [shape: f32[8,32], index: 0, kind: input, shape index: {}]
  %s1 = inlined_call_operand.vmem [shape: f32[8,32], index: 1, kind: input, shape index: {}]
  %s2 = inlined_call_operand.vmem [shape: f32[8,32], index: 2, kind: input, shape index: {}]
  %s3 = inlined_call_operand.vmem [shape: bf16[32,512], index: 3, kind: input, shape index: {}]
  %s4 = inlined_call_operand.vmem [shape: f32[1,512], index: 4, kind: input, shape index: {}]
  %s5 = inlined_call_operand.vmem [shape: bf16[32,512], index: 5, kind: input, shape index: {}]
  %s6 = inlined_call_operand.vmem [shape: f32[1,512], index: 6, kind: input, shape index: {}]
  %s7 = inlined_call_operand.vmem [shape: bf16[512,4], index: 7, kind: input, shape index: {}]
  %s8 = inlined_call_operand.vmem [shape: bf16[512,4], index: 8, kind: input, shape index: {}]
  %s9 = inlined_call_operand.vmem [shape: f32[1,4], index: 9, kind: input, shape index: {}]
  %s10 = inlined_call_operand.vmem [shape: f32[4,256], index: 10, kind: input, shape index: {}]
  %s11 = inlined_call_operand.vmem [shape: f32[32,128], index: 11, kind: input, shape index: {}]
  %s12 = inlined_call_operand.vmem [shape: f32[8,128], index: 12, kind: output, shape index: {}]
  %s13 = sld [smem:[#allocation0]]
  $region58: #{group_lstm_cell.1} parent=0
    _
  %s15 = ssub.s32 1, %s13
  %s16 = scalar_select 0, %s15, %s13
  // Predicated region
  $region2: #{group_lstm_cell.1} parent=0 // pred_check
    _
  $region3: #{group_lstm_cell.1} parent=0 // pred_check_branch
    %18 = sbr.rel (0) target = $region5
  $region4: #{group_lstm_cell.1} parent=0 // pred_region
    _
  $region5: #{group_lstm_cell.1} parent=0 // pred_fallthru
    _
  // Predicated region
  $region6: #{group_lstm_cell.1} parent=0 // pred_check
    _
  $region7: #{group_lstm_cell.1} parent=0 // pred_check_branch
    %20 = sbr.rel (0) target = $region9
  $region8: #{group_lstm_cell.1} parent=0 // pred_region
    _
  $region9: #{group_lstm_cell.1} parent=0 // pred_fallthru
    _
  // Predicated region
  $region10: #{group_lstm_cell.1} parent=0 // pred_check
    _
  $region11: #{group_lstm_cell.1} parent=0 // pred_check_branch
    %22 = sbr.rel (0) target = $region13
  $region12: #{group_lstm_cell.1} parent=0 // pred_region
    _
  $region13: #{group_lstm_cell.1} parent=0 // pred_fallthru
    _
  // Predicated region
  $region14: #{group_lstm_cell.1} parent=0 // pred_check
    _
  $region15: #{group_lstm_cell.1} parent=0 // pred_check_branch
    %24 = sbr.rel (0) target = $region17
  $region16: #{group_lstm_cell.1} parent=0 // pred_region
    _
  $region17: #{group_lstm_cell.1} parent=0 // pred_fallthru
    _
  // Predicated region
  $region18: #{group_lstm_cell.1} parent=0 // pred_check
    _
  $region19: #{group_lstm_cell.1} parent=0 // pred_check_branch
    %26 = sbr.rel (0) target = $region21
  $region20: #{group_lstm_cell.1} parent=0 // pred_region
    _
  $region21: #{group_lstm_cell.1} parent=0 // pred_fallthru
    _
  // Predicated region
  $region22: #{group_lstm_cell.1} parent=0 // pred_check
    _
  $region23: #{group_lstm_cell.1} parent=0 // pred_check_branch
    %28 = sbr.rel (0) target = $region25
  $region24: #{group_lstm_cell.1} parent=0 // pred_region
    _
  $region25: #{group_lstm_cell.1} parent=0 // pred_fallthru
    _
  // Predicated region
  $region26: #{group_lstm_cell.1} parent=0 // pred_check
    _
  $region27: #{group_lstm_cell.1} parent=0 // pred_check_branch
    %30 = sbr.rel (0) target = $region29
  $region28: #{group_lstm_cell.1} parent=0 // pred_region
    _
  $region29: #{group_lstm_cell.1} parent=0 // pred_fallthru
    _
  // Predicated region
  $region30: #{group_lstm_cell.1} parent=0 // pred_check
    _
  $region31: #{group_lstm_cell.1} parent=0 // pred_check_branch
    %32 = sbr.rel (0) target = $region33
  $region32: #{group_lstm_cell.1} parent=0 // pred_region
    _
  $region33: #{group_lstm_cell.1} parent=0 // pred_fallthru
    _
  // Predicated region
  $region34: #{group_lstm_cell.1} parent=0 // pred_check
    _
  $region35: #{group_lstm_cell.1} parent=0 // pred_check_branch
    %34 = sbr.rel (0) target = $region37
  $region36: #{group_lstm_cell.1} parent=0 // pred_region
    _
  $region37: #{group_lstm_cell.1} parent=0 // pred_fallthru
    _
  // Predicated region
  $region38: #{group_lstm_cell.1} parent=0 // pred_check
    _
  $region39: #{group_lstm_cell.1} parent=0 // pred_check_branch
    %36 = sbr.rel (0) target = $region41
  $region40: #{group_lstm_cell.1} parent=0 // pred_region
    _
  $region41: #{group_lstm_cell.1} parent=0 // pred_fallthru
    _
  // Predicated region
  $region42: #{group_lstm_cell.1} parent=0 // pred_check
    _
  $region43: #{group_lstm_cell.1} parent=0 // pred_check_branch
    %38 = sbr.rel (0) target = $region45
  $region44: #{group_lstm_cell.1} parent=0 // pred_region
    _
  $region45: #{group_lstm_cell.1} parent=0 // pred_fallthru
    _
  // Predicated region
  $region46: #{group_lstm_cell.1} parent=0 // pred_check
    _
  $region47: #{group_lstm_cell.1} parent=0 // pred_check_branch
    %40 = sbr.rel (0) target = $region49
  $region48: #{group_lstm_cell.1} parent=0 // pred_region
    _
  $region49: #{group_lstm_cell.1} parent=0 // pred_fallthru
    _
  %v42 = vld [vmem:[%s0] sm:$0xff]
  %v43 = vpack.c.bf16 %v42, %v42
  %v44 = vld [vmem:[%s1] sm:$0xff]
  %v45 = vpack.c.bf16 %v44, %v44
  %v46 = vld [vmem:[%s3] sm:$0xff]
  %v47 = vld [vmem:[%s3 + $0x8] sm:$0xff]
  %v48 = vld [vmem:[%s3 + $0x10] sm:$0xff]
  %v49 = vld [vmem:[%s3 + $0x18] sm:$0xff]
  %v50 = vld [vmem:[%s3 + $0x20] sm:$0xff]
  %v51 = vld [vmem:[%s3 + $0x28] sm:$0xff]
  %v52 = vld [vmem:[%s3 + $0x30] sm:$0xff]
  %v53 = vld [vmem:[%s3 + $0x38] sm:$0xff]
  %v54 = vld [vmem:[%s4] sm:$0xf]
  %v56 = vlaneseq
  %v57 = vshrl.u32 %v56, 7
  %v58 = vsub.s32 0, %v57
  %v59 = vrot.slane %v54, %v58
  %v60 = vlaneseq
  %v61 = vshrl.u32 %v60, 7
  %v62 = vsub.s32 1, %v61
  %v63 = vrot.slane %v54, %v62
  %v64 = vlaneseq
  %v65 = vshrl.u32 %v64, 7
  %v66 = vsub.s32 2, %v65
  %v67 = vrot.slane %v54, %v66
  %v68 = vlaneseq
  %v69 = vshrl.u32 %v68, 7
  %v70 = vsub.s32 3, %v69
  %v71 = vrot.slane %v54, %v70
  %v84 = vunpack.c.l.b16 %v46
  %v85 = vunpack.c.h.b16 %v46
  %v86 = vunpack.c.l.b16 %v47
  %v87 = vunpack.c.h.b16 %v47
  %v88 = vunpack.c.l.b16 %v48
  %v89 = vunpack.c.h.b16 %v48
  %v90 = vunpack.c.l.b16 %v49
  %v91 = vunpack.c.h.b16 %v49
  %v92 = vunpack.c.l.b16 %v50
  %v93 = vunpack.c.h.b16 %v50
  %v94 = vunpack.c.l.b16 %v51
  %v95 = vunpack.c.h.b16 %v51
  %v96 = vunpack.c.l.b16 %v52
  %v97 = vunpack.c.h.b16 %v52
  %v98 = vunpack.c.l.b16 %v53
  %v99 = vunpack.c.h.b16 %v53
  %v100 = vpack.c.b16 %v88, %v84
  %v101 = vpack.c.b16 %v89, %v85
  %v102 = vpack.c.b16 %v90, %v86
  %v103 = vpack.c.b16 %v91, %v87
  %v104 = vpack.c.b16 %v96, %v92
  %v105 = vpack.c.b16 %v97, %v93
  %v106 = vpack.c.b16 %v98, %v94
  %v107 = vpack.c.b16 %v99, %v95
  %vm116 = vcmask 261120
  %v118 = vsel %vm116, %v43, 0
  %120 = vmatprep.subr.bf16.mxu0 0
  %121 = vmatpush1.bf16.msra.mxu0 0
  %122 = vmatprep.subr.bf16.mxu0 0
  %123 = vmatpush1.bf16.msra.mxu0 0
  %124 = vmatprep.subr.bf16.mxu0 0
  %125 = vmatpush1.bf16.msra.mxu0 0
  %126 = vmatprep.subr.bf16.mxu0 0
  %127 = vmatpush1.bf16.msra.mxu0 0
  %128 = vmatprep.subr.bf16.mxu0 0
  %129 = vmatpush1.bf16.msra.mxu0 0
  %130 = vmatprep.subr.bf16.mxu0 0
  %131 = vmatpush1.bf16.msra.mxu0 0
  %132 = vmatprep.subr.bf16.mxu0 %v105
  %133 = vmatpush1.bf16.msra.mxu0 %v104
  %134 = vmatprep.subr.bf16.mxu0 %v101
  %135 = vmatpush1.bf16.msra.mxu0 %v100
  %136 = vmatprep.subr.bf16.mxu0 0
  %137 = vmatpush2.bf16.msra.mxu0 0
  %138 = vmatprep.subr.bf16.mxu0 0
  %139 = vmatpush2.bf16.msra.mxu0 0
  %140 = vmatprep.subr.bf16.mxu0 0
  %141 = vmatpush2.bf16.msra.mxu0 0
  %142 = vmatprep.subr.bf16.mxu0 0
  %143 = vmatpush2.bf16.msra.mxu0 0
  %144 = vmatprep.subr.bf16.mxu0 0
  %145 = vmatpush2.bf16.msra.mxu0 0
  %146 = vmatprep.subr.bf16.mxu0 0
  %147 = vmatpush2.bf16.msra.mxu0 0
  %148 = vmatprep.subr.bf16.mxu0 0
  %149 = vmatpush2.bf16.msra.mxu0 0
  %150 = vmatprep.subr.bf16.mxu0 0
  %151 = vmatpush2.bf16.msra.mxu0 0
  %152 = vmatprep.mubr.bf16.mxu0 0
  %153 = vmatmul.mubr.bf16.gmra.mxu0 %v118
  %v154 = vpop.f32.mrf.mxu0
  %v155 = vadd.f32 %v59, %v154
  %v156 = vpop.f32.mrf.mxu0
  %v157 = vadd.f32 %v63, %v156
  %v158 = vpop.f32.mrf.mxu0
  %v159 = vpop.f32.mrf.mxu0
  %160 = vdwg.mxu0
  %161 = vmatprep.subr.bf16.mxu0 0
  %162 = vmatpush1.bf16.msra.mxu0 0
  %163 = vmatprep.subr.bf16.mxu0 0
  %164 = vmatpush1.bf16.msra.mxu0 0
  %165 = vmatprep.subr.bf16.mxu0 0
  %166 = vmatpush1.bf16.msra.mxu0 0
  %167 = vmatprep.subr.bf16.mxu0 0
  %168 = vmatpush1.bf16.msra.mxu0 0
  %169 = vmatprep.subr.bf16.mxu0 0
  %170 = vmatpush1.bf16.msra.mxu0 0
  %171 = vmatprep.subr.bf16.mxu0 0
  %172 = vmatpush1.bf16.msra.mxu0 0
  %173 = vmatprep.subr.bf16.mxu0 %v107
  %174 = vmatpush1.bf16.msra.mxu0 %v106
  %175 = vmatprep.subr.bf16.mxu0 %v103
  %176 = vmatpush1.bf16.msra.mxu0 %v102
  %177 = vmatprep.subr.bf16.mxu0 0
  %178 = vmatpush2.bf16.msra.mxu0 0
  %179 = vmatprep.subr.bf16.mxu0 0
  %180 = vmatpush2.bf16.msra.mxu0 0
  %181 = vmatprep.subr.bf16.mxu0 0
  %182 = vmatpush2.bf16.msra.mxu0 0
  %183 = vmatprep.subr.bf16.mxu0 0
  %184 = vmatpush2.bf16.msra.mxu0 0
  %185 = vmatprep.subr.bf16.mxu0 0
  %186 = vmatpush2.bf16.msra.mxu0 0
  %187 = vmatprep.subr.bf16.mxu0 0
  %188 = vmatpush2.bf16.msra.mxu0 0
  %189 = vmatprep.subr.bf16.mxu0 0
  %190 = vmatpush2.bf16.msra.mxu0 0
  %191 = vmatprep.subr.bf16.mxu0 0
  %192 = vmatpush2.bf16.msra.mxu0 0
  %193 = vmatprep.mubr.bf16.mxu0 0
  %194 = vmatmul.mubr.bf16.gmra.mxu0 %v118
  %v195 = vpop.f32.mrf.mxu0
  %v196 = vadd.f32 %v67, %v195
  %v197 = vpop.f32.mrf.mxu0
  %v198 = vadd.f32 %v71, %v197
  %v199 = vpop.f32.mrf.mxu0
  %v200 = vpop.f32.mrf.mxu0
  %201 = vdwg.mxu0
  %v202 = vld [vmem:[%s5] sm:$0xff]
  %v203 = vld [vmem:[%s5 + $0x8] sm:$0xff]
  %v204 = vld [vmem:[%s5 + $0x10] sm:$0xff]
  %v205 = vld [vmem:[%s5 + $0x18] sm:$0xff]
  %v206 = vld [vmem:[%s5 + $0x20] sm:$0xff]
  %v207 = vld [vmem:[%s5 + $0x28] sm:$0xff]
  %v208 = vld [vmem:[%s5 + $0x30] sm:$0xff]
  %v209 = vld [vmem:[%s5 + $0x38] sm:$0xff]
  %v210 = vld [vmem:[%s6] sm:$0xf]
  %v212 = vlaneseq
  %v213 = vshrl.u32 %v212, 7
  %v214 = vsub.s32 0, %v213
  %v215 = vrot.slane %v210, %v214
  %v216 = vlaneseq
  %v217 = vshrl.u32 %v216, 7
  %v218 = vsub.s32 1, %v217
  %v219 = vrot.slane %v210, %v218
  %v220 = vlaneseq
  %v221 = vshrl.u32 %v220, 7
  %v222 = vsub.s32 2, %v221
  %v223 = vrot.slane %v210, %v222
  %v224 = vlaneseq
  %v225 = vshrl.u32 %v224, 7
  %v226 = vsub.s32 3, %v225
  %v227 = vrot.slane %v210, %v226
  %v240 = vunpack.c.l.b16 %v202
  %v241 = vunpack.c.h.b16 %v202
  %v242 = vunpack.c.l.b16 %v203
  %v243 = vunpack.c.h.b16 %v203
  %v244 = vunpack.c.l.b16 %v204
  %v245 = vunpack.c.h.b16 %v204
  %v246 = vunpack.c.l.b16 %v205
  %v247 = vunpack.c.h.b16 %v205
  %v248 = vunpack.c.l.b16 %v206
  %v249 = vunpack.c.h.b16 %v206
  %v250 = vunpack.c.l.b16 %v207
  %v251 = vunpack.c.h.b16 %v207
  %v252 = vunpack.c.l.b16 %v208
  %v253 = vunpack.c.h.b16 %v208
  %v254 = vunpack.c.l.b16 %v209
  %v255 = vunpack.c.h.b16 %v209
  %v256 = vpack.c.b16 %v244, %v240
  %v257 = vpack.c.b16 %v245, %v241
  %v258 = vpack.c.b16 %v246, %v242
  %v259 = vpack.c.b16 %v247, %v243
  %v260 = vpack.c.b16 %v252, %v248
  %v261 = vpack.c.b16 %v253, %v249
  %v262 = vpack.c.b16 %v254, %v250
  %v263 = vpack.c.b16 %v255, %v251
  %v273 = vsel %vm116, %v45, 0
  %275 = vmatprep.subr.bf16.mxu0 0
  %276 = vmatpush1.bf16.msra.mxu0 0
  %277 = vmatprep.subr.bf16.mxu0 0
  %278 = vmatpush1.bf16.msra.mxu0 0
  %279 = vmatprep.subr.bf16.mxu0 0
  %280 = vmatpush1.bf16.msra.mxu0 0
  %281 = vmatprep.subr.bf16.mxu0 0
  %282 = vmatpush1.bf16.msra.mxu0 0
  %283 = vmatprep.subr.bf16.mxu0 0
  %284 = vmatpush1.bf16.msra.mxu0 0
  %285 = vmatprep.subr.bf16.mxu0 0
  %286 = vmatpush1.bf16.msra.mxu0 0
  %287 = vmatprep.subr.bf16.mxu0 %v261
  %288 = vmatpush1.bf16.msra.mxu0 %v260
  %289 = vmatprep.subr.bf16.mxu0 %v257
  %290 = vmatpush1.bf16.msra.mxu0 %v256
  %291 = vmatprep.subr.bf16.mxu0 0
  %292 = vmatpush2.bf16.msra.mxu0 0
  %293 = vmatprep.subr.bf16.mxu0 0
  %294 = vmatpush2.bf16.msra.mxu0 0
  %295 = vmatprep.subr.bf16.mxu0 0
  %296 = vmatpush2.bf16.msra.mxu0 0
  %297 = vmatprep.subr.bf16.mxu0 0
  %298 = vmatpush2.bf16.msra.mxu0 0
  %299 = vmatprep.subr.bf16.mxu0 0
  %300 = vmatpush2.bf16.msra.mxu0 0
  %301 = vmatprep.subr.bf16.mxu0 0
  %302 = vmatpush2.bf16.msra.mxu0 0
  %303 = vmatprep.subr.bf16.mxu0 0
  %304 = vmatpush2.bf16.msra.mxu0 0
  %305 = vmatprep.subr.bf16.mxu0 0
  %306 = vmatpush2.bf16.msra.mxu0 0
  %307 = vmatprep.mubr.bf16.mxu0 0
  %308 = vmatmul.mubr.bf16.gmra.mxu0 %v273
  %v309 = vpop.f32.mrf.mxu0
  %v310 = vadd.f32 %v215, %v309
  %v311 = vpop.f32.mrf.mxu0
  %v312 = vadd.f32 %v219, %v311
  %v313 = vpop.f32.mrf.mxu0
  %v314 = vpop.f32.mrf.mxu0
  %315 = vdwg.mxu0
  %316 = vmatprep.subr.bf16.mxu0 0
  %317 = vmatpush1.bf16.msra.mxu0 0
  %318 = vmatprep.subr.bf16.mxu0 0
  %319 = vmatpush1.bf16.msra.mxu0 0
  %320 = vmatprep.subr.bf16.mxu0 0
  %321 = vmatpush1.bf16.msra.mxu0 0
  %322 = vmatprep.subr.bf16.mxu0 0
  %323 = vmatpush1.bf16.msra.mxu0 0
  %324 = vmatprep.subr.bf16.mxu0 0
  %325 = vmatpush1.bf16.msra.mxu0 0
  %326 = vmatprep.subr.bf16.mxu0 0
  %327 = vmatpush1.bf16.msra.mxu0 0
  %328 = vmatprep.subr.bf16.mxu0 %v263
  %329 = vmatpush1.bf16.msra.mxu0 %v262
  %330 = vmatprep.subr.bf16.mxu0 %v259
  %331 = vmatpush1.bf16.msra.mxu0 %v258
  %332 = vmatprep.subr.bf16.mxu0 0
  %333 = vmatpush2.bf16.msra.mxu0 0
  %334 = vmatprep.subr.bf16.mxu0 0
  %335 = vmatpush2.bf16.msra.mxu0 0
  %336 = vmatprep.subr.bf16.mxu0 0
  %337 = vmatpush2.bf16.msra.mxu0 0
  %338 = vmatprep.subr.bf16.mxu0 0
  %339 = vmatpush2.bf16.msra.mxu0 0
  %340 = vmatprep.subr.bf16.mxu0 0
  %341 = vmatpush2.bf16.msra.mxu0 0
  %342 = vmatprep.subr.bf16.mxu0 0
  %343 = vmatpush2.bf16.msra.mxu0 0
  %344 = vmatprep.subr.bf16.mxu0 0
  %345 = vmatpush2.bf16.msra.mxu0 0
  %346 = vmatprep.subr.bf16.mxu0 0
  %347 = vmatpush2.bf16.msra.mxu0 0
  %348 = vmatprep.mubr.bf16.mxu0 0
  %349 = vmatmul.mubr.bf16.gmra.mxu0 %v273
  %v350 = vpop.f32.mrf.mxu0
  %v351 = vadd.f32 %v223, %v350
  %v352 = vpop.f32.mrf.mxu0
  %v353 = vadd.f32 %v227, %v352
  %v354 = vpop.f32.mrf.mxu0
  %v355 = vpop.f32.mrf.mxu0
  %356 = vdwg.mxu0
  %v357 = vmax.f32 %v155, 0.0
  %v358 = vmax.f32 %v157, 0.0
  %v359 = vmax.f32 %v196, 0.0
  %v360 = vmax.f32 %v198, 0.0
  %v361 = vpack.c.bf16 %v357, %v357
  %v362 = vpack.c.bf16 %v358, %v358
  %v363 = vpack.c.bf16 %v359, %v359
  %v364 = vpack.c.bf16 %v360, %v360
  %v365 = vmax.f32 %v310, 0.0
  %v366 = vmax.f32 %v312, 0.0
  %v367 = vmax.f32 %v351, 0.0
  %v368 = vmax.f32 %v353, 0.0
  %v369 = vpack.c.bf16 %v365, %v365
  %v370 = vpack.c.bf16 %v366, %v366
  %v371 = vpack.c.bf16 %v367, %v367
  %v372 = vpack.c.bf16 %v368, %v368
  %v373 = vld [vmem:[%s7] sm:$0xf]
  %v374 = vld [vmem:[%s7 + $0x4] sm:$0xf]
  %v375 = vld [vmem:[%s7 + $0x8] sm:$0xf]
  %v376 = vld [vmem:[%s7 + $0xc] sm:$0xf]
  %v377 = vld [vmem:[%s7 + $0x10] sm:$0xf]
  %v378 = vld [vmem:[%s7 + $0x14] sm:$0xf]
  %v379 = vld [vmem:[%s7 + $0x18] sm:$0xf]
  %v380 = vld [vmem:[%s7 + $0x1c] sm:$0xf]
  %v381 = vld [vmem:[%s7 + $0x20] sm:$0xf]
  %v382 = vld [vmem:[%s7 + $0x24] sm:$0xf]
  %v383 = vld [vmem:[%s7 + $0x28] sm:$0xf]
  %v384 = vld [vmem:[%s7 + $0x2c] sm:$0xf]
  %v385 = vld [vmem:[%s7 + $0x30] sm:$0xf]
  %v386 = vld [vmem:[%s7 + $0x34] sm:$0xf]
  %v387 = vld [vmem:[%s7 + $0x38] sm:$0xf]
  %v388 = vld [vmem:[%s7 + $0x3c] sm:$0xf]
  %v389 = vld [vmem:[%s7 + $0x40] sm:$0xf]
  %v390 = vld [vmem:[%s7 + $0x44] sm:$0xf]
  %v391 = vld [vmem:[%s7 + $0x48] sm:$0xf]
  %v392 = vld [vmem:[%s7 + $0x4c] sm:$0xf]
  %v393 = vld [vmem:[%s7 + $0x50] sm:$0xf]
  %v394 = vld [vmem:[%s7 + $0x54] sm:$0xf]
  %v395 = vld [vmem:[%s7 + $0x58] sm:$0xf]
  %v396 = vld [vmem:[%s7 + $0x5c] sm:$0xf]
  %v397 = vld [vmem:[%s7 + $0x60] sm:$0xf]
  %v398 = vld [vmem:[%s7 + $0x64] sm:$0xf]
  %v399 = vld [vmem:[%s7 + $0x68] sm:$0xf]
  %v400 = vld [vmem:[%s7 + $0x6c] sm:$0xf]
  %v401 = vld [vmem:[%s7 + $0x70] sm:$0xf]
  %v402 = vld [vmem:[%s7 + $0x74] sm:$0xf]
  %v403 = vld [vmem:[%s7 + $0x78] sm:$0xf]
  %v404 = vld [vmem:[%s7 + $0x7c] sm:$0xf]
  %v405 = vld [vmem:[%s7 + $0x80] sm:$0xf]
  %v406 = vld [vmem:[%s7 + $0x84] sm:$0xf]
  %v407 = vld [vmem:[%s7 + $0x88] sm:$0xf]
  %v408 = vld [vmem:[%s7 + $0x8c] sm:$0xf]
  %v409 = vld [vmem:[%s7 + $0x90] sm:$0xf]
  %v410 = vld [vmem:[%s7 + $0x94] sm:$0xf]
  %v411 = vld [vmem:[%s7 + $0x98] sm:$0xf]
  %v412 = vld [vmem:[%s7 + $0x9c] sm:$0xf]
  %v413 = vld [vmem:[%s7 + $0xa0] sm:$0xf]
  %v414 = vld [vmem:[%s7 + $0xa4] sm:$0xf]
  %v415 = vld [vmem:[%s7 + $0xa8] sm:$0xf]
  %v416 = vld [vmem:[%s7 + $0xac] sm:$0xf]
  %v417 = vld [vmem:[%s7 + $0xb0] sm:$0xf]
  %v418 = vld [vmem:[%s7 + $0xb4] sm:$0xf]
  %v419 = vld [vmem:[%s7 + $0xb8] sm:$0xf]
  %v420 = vld [vmem:[%s7 + $0xbc] sm:$0xf]
  %v421 = vld [vmem:[%s7 + $0xc0] sm:$0xf]
  %v422 = vld [vmem:[%s7 + $0xc4] sm:$0xf]
  %v423 = vld [vmem:[%s7 + $0xc8] sm:$0xf]
  %v424 = vld [vmem:[%s7 + $0xcc] sm:$0xf]
  %v425 = vld [vmem:[%s7 + $0xd0] sm:$0xf]
  %v426 = vld [vmem:[%s7 + $0xd4] sm:$0xf]
  %v427 = vld [vmem:[%s7 + $0xd8] sm:$0xf]
  %v428 = vld [vmem:[%s7 + $0xdc] sm:$0xf]
  %v429 = vld [vmem:[%s7 + $0xe0] sm:$0xf]
  %v430 = vld [vmem:[%s7 + $0xe4] sm:$0xf]
  %v431 = vld [vmem:[%s7 + $0xe8] sm:$0xf]
  %v432 = vld [vmem:[%s7 + $0xec] sm:$0xf]
  %v433 = vld [vmem:[%s7 + $0xf0] sm:$0xf]
  %v434 = vld [vmem:[%s7 + $0xf4] sm:$0xf]
  %v435 = vld [vmem:[%s7 + $0xf8] sm:$0xf]
  %v436 = vld [vmem:[%s7 + $0xfc] sm:$0xf]
  %v437 = vld [vmem:[%s8] sm:$0xf]
  %v438 = vld [vmem:[%s8 + $0x4] sm:$0xf]
  %v439 = vld [vmem:[%s8 + $0x8] sm:$0xf]
  %v440 = vld [vmem:[%s8 + $0xc] sm:$0xf]
  %v441 = vld [vmem:[%s8 + $0x10] sm:$0xf]
  %v442 = vld [vmem:[%s8 + $0x14] sm:$0xf]
  %v443 = vld [vmem:[%s8 + $0x18] sm:$0xf]
  %v444 = vld [vmem:[%s8 + $0x1c] sm:$0xf]
  %v445 = vld [vmem:[%s8 + $0x20] sm:$0xf]
  %v446 = vld [vmem:[%s8 + $0x24] sm:$0xf]
  %v447 = vld [vmem:[%s8 + $0x28] sm:$0xf]
  %v448 = vld [vmem:[%s8 + $0x2c] sm:$0xf]
  %v449 = vld [vmem:[%s8 + $0x30] sm:$0xf]
  %v450 = vld [vmem:[%s8 + $0x34] sm:$0xf]
  %v451 = vld [vmem:[%s8 + $0x38] sm:$0xf]
  %v452 = vld [vmem:[%s8 + $0x3c] sm:$0xf]
  %v453 = vld [vmem:[%s8 + $0x40] sm:$0xf]
  %v454 = vld [vmem:[%s8 + $0x44] sm:$0xf]
  %v455 = vld [vmem:[%s8 + $0x48] sm:$0xf]
  %v456 = vld [vmem:[%s8 + $0x4c] sm:$0xf]
  %v457 = vld [vmem:[%s8 + $0x50] sm:$0xf]
  %v458 = vld [vmem:[%s8 + $0x54] sm:$0xf]
  %v459 = vld [vmem:[%s8 + $0x58] sm:$0xf]
  %v460 = vld [vmem:[%s8 + $0x5c] sm:$0xf]
  %v461 = vld [vmem:[%s8 + $0x60] sm:$0xf]
  %v462 = vld [vmem:[%s8 + $0x64] sm:$0xf]
  %v463 = vld [vmem:[%s8 + $0x68] sm:$0xf]
  %v464 = vld [vmem:[%s8 + $0x6c] sm:$0xf]
  %v465 = vld [vmem:[%s8 + $0x70] sm:$0xf]
  %v466 = vld [vmem:[%s8 + $0x74] sm:$0xf]
  %v467 = vld [vmem:[%s8 + $0x78] sm:$0xf]
  %v468 = vld [vmem:[%s8 + $0x7c] sm:$0xf]
  %v469 = vld [vmem:[%s8 + $0x80] sm:$0xf]
  %v470 = vld [vmem:[%s8 + $0x84] sm:$0xf]
  %v471 = vld [vmem:[%s8 + $0x88] sm:$0xf]
  %v472 = vld [vmem:[%s8 + $0x8c] sm:$0xf]
  %v473 = vld [vmem:[%s8 + $0x90] sm:$0xf]
  %v474 = vld [vmem:[%s8 + $0x94] sm:$0xf]
  %v475 = vld [vmem:[%s8 + $0x98] sm:$0xf]
  %v476 = vld [vmem:[%s8 + $0x9c] sm:$0xf]
  %v477 = vld [vmem:[%s8 + $0xa0] sm:$0xf]
  %v478 = vld [vmem:[%s8 + $0xa4] sm:$0xf]
  %v479 = vld [vmem:[%s8 + $0xa8] sm:$0xf]
  %v480 = vld [vmem:[%s8 + $0xac] sm:$0xf]
  %v481 = vld [vmem:[%s8 + $0xb0] sm:$0xf]
  %v482 = vld [vmem:[%s8 + $0xb4] sm:$0xf]
  %v483 = vld [vmem:[%s8 + $0xb8] sm:$0xf]
  %v484 = vld [vmem:[%s8 + $0xbc] sm:$0xf]
  %v485 = vld [vmem:[%s8 + $0xc0] sm:$0xf]
  %v486 = vld [vmem:[%s8 + $0xc4] sm:$0xf]
  %v487 = vld [vmem:[%s8 + $0xc8] sm:$0xf]
  %v488 = vld [vmem:[%s8 + $0xcc] sm:$0xf]
  %v489 = vld [vmem:[%s8 + $0xd0] sm:$0xf]
  %v490 = vld [vmem:[%s8 + $0xd4] sm:$0xf]
  %v491 = vld [vmem:[%s8 + $0xd8] sm:$0xf]
  %v492 = vld [vmem:[%s8 + $0xdc] sm:$0xf]
  %v493 = vld [vmem:[%s8 + $0xe0] sm:$0xf]
  %v494 = vld [vmem:[%s8 + $0xe4] sm:$0xf]
  %v495 = vld [vmem:[%s8 + $0xe8] sm:$0xf]
  %v496 = vld [vmem:[%s8 + $0xec] sm:$0xf]
  %v497 = vld [vmem:[%s8 + $0xf0] sm:$0xf]
  %v498 = vld [vmem:[%s8 + $0xf4] sm:$0xf]
  %v499 = vld [vmem:[%s8 + $0xf8] sm:$0xf]
  %v500 = vld [vmem:[%s8 + $0xfc] sm:$0xf]
  %v565 = vunpack.c.l.b16 %v437
  %v566 = vunpack.c.l.b16 %v438
  %v567 = vunpack.c.l.b16 %v439
  %v568 = vunpack.c.l.b16 %v440
  %v569 = vunpack.c.l.b16 %v441
  %v570 = vunpack.c.l.b16 %v442
  %v571 = vunpack.c.l.b16 %v443
  %v572 = vunpack.c.l.b16 %v444
  %v573 = vunpack.c.l.b16 %v445
  %v574 = vunpack.c.l.b16 %v446
  %v575 = vunpack.c.l.b16 %v447
  %v576 = vunpack.c.l.b16 %v448
  %v577 = vunpack.c.l.b16 %v449
  %v578 = vunpack.c.l.b16 %v450
  %v579 = vunpack.c.l.b16 %v451
  %v580 = vunpack.c.l.b16 %v452
  %v581 = vunpack.c.l.b16 %v453
  %v582 = vunpack.c.l.b16 %v454
  %v583 = vunpack.c.l.b16 %v455
  %v584 = vunpack.c.l.b16 %v456
  %v585 = vunpack.c.l.b16 %v457
  %v586 = vunpack.c.l.b16 %v458
  %v587 = vunpack.c.l.b16 %v459
  %v588 = vunpack.c.l.b16 %v460
  %v589 = vunpack.c.l.b16 %v461
  %v590 = vunpack.c.l.b16 %v462
  %v591 = vunpack.c.l.b16 %v463
  %v592 = vunpack.c.l.b16 %v464
  %v593 = vunpack.c.l.b16 %v465
  %v594 = vunpack.c.l.b16 %v466
  %v595 = vunpack.c.l.b16 %v467
  %v596 = vunpack.c.l.b16 %v468
  %v597 = vunpack.c.l.b16 %v469
  %v598 = vunpack.c.l.b16 %v470
  %v599 = vunpack.c.l.b16 %v471
  %v600 = vunpack.c.l.b16 %v472
  %v601 = vunpack.c.l.b16 %v473
  %v602 = vunpack.c.l.b16 %v474
  %v603 = vunpack.c.l.b16 %v475
  %v604 = vunpack.c.l.b16 %v476
  %v605 = vunpack.c.l.b16 %v477
  %v606 = vunpack.c.l.b16 %v478
  %v607 = vunpack.c.l.b16 %v479
  %v608 = vunpack.c.l.b16 %v480
  %v609 = vunpack.c.l.b16 %v481
  %v610 = vunpack.c.l.b16 %v482
  %v611 = vunpack.c.l.b16 %v483
  %v612 = vunpack.c.l.b16 %v484
  %v613 = vunpack.c.l.b16 %v485
  %v614 = vunpack.c.l.b16 %v486
  %v615 = vunpack.c.l.b16 %v487
  %v616 = vunpack.c.l.b16 %v488
  %v617 = vunpack.c.l.b16 %v489
  %v618 = vunpack.c.l.b16 %v490
  %v619 = vunpack.c.l.b16 %v491
  %v620 = vunpack.c.l.b16 %v492
  %v621 = vunpack.c.l.b16 %v493
  %v622 = vunpack.c.l.b16 %v494
  %v623 = vunpack.c.l.b16 %v495
  %v624 = vunpack.c.l.b16 %v496
  %v625 = vunpack.c.l.b16 %v497
  %v626 = vunpack.c.l.b16 %v498
  %v627 = vunpack.c.l.b16 %v499
  %v628 = vunpack.c.l.b16 %v500
  %v629 = vpack.c.b16 %v566, %v565
  %v630 = vpack.c.b16 %v568, %v567
  %v631 = vpack.c.b16 %v570, %v569
  %v632 = vpack.c.b16 %v572, %v571
  %v633 = vpack.c.b16 %v574, %v573
  %v634 = vpack.c.b16 %v576, %v575
  %v635 = vpack.c.b16 %v578, %v577
  %v636 = vpack.c.b16 %v580, %v579
  %v637 = vpack.c.b16 %v582, %v581
  %v638 = vpack.c.b16 %v584, %v583
  %v639 = vpack.c.b16 %v586, %v585
  %v640 = vpack.c.b16 %v588, %v587
  %v641 = vpack.c.b16 %v590, %v589
  %v642 = vpack.c.b16 %v592, %v591
  %v643 = vpack.c.b16 %v594, %v593
  %v644 = vpack.c.b16 %v596, %v595
  %v645 = vpack.c.b16 %v598, %v597
  %v646 = vpack.c.b16 %v600, %v599
  %v647 = vpack.c.b16 %v602, %v601
  %v648 = vpack.c.b16 %v604, %v603
  %v649 = vpack.c.b16 %v606, %v605
  %v650 = vpack.c.b16 %v608, %v607
  %v651 = vpack.c.b16 %v610, %v609
  %v652 = vpack.c.b16 %v612, %v611
  %v653 = vpack.c.b16 %v614, %v613
  %v654 = vpack.c.b16 %v616, %v615
  %v655 = vpack.c.b16 %v618, %v617
  %v656 = vpack.c.b16 %v620, %v619
  %v657 = vpack.c.b16 %v622, %v621
  %v658 = vpack.c.b16 %v624, %v623
  %v659 = vpack.c.b16 %v626, %v625
  %v660 = vpack.c.b16 %v628, %v627
  %693 = vmatprep.subr.bf16.mxu0 0
  %694 = vmatpush1.bf16.msra.mxu0 %v636
  %695 = vmatprep.subr.bf16.mxu0 0
  %696 = vmatpush1.bf16.msra.mxu0 %v635
  %697 = vmatprep.subr.bf16.mxu0 0
  %698 = vmatpush1.bf16.msra.mxu0 %v634
  %699 = vmatprep.subr.bf16.mxu0 0
  %700 = vmatpush1.bf16.msra.mxu0 %v633
  %701 = vmatprep.subr.bf16.mxu0 0
  %702 = vmatpush1.bf16.msra.mxu0 %v632
  %703 = vmatprep.subr.bf16.mxu0 0
  %704 = vmatpush1.bf16.msra.mxu0 %v631
  %705 = vmatprep.subr.bf16.mxu0 0
  %706 = vmatpush1.bf16.msra.mxu0 %v630
  %707 = vmatprep.subr.bf16.mxu0 0
  %708 = vmatpush1.bf16.msra.mxu0 %v629
  %709 = vmatprep.subr.bf16.mxu0 0
  %710 = vmatpush2.bf16.msra.mxu0 %v644
  %711 = vmatprep.subr.bf16.mxu0 0
  %712 = vmatpush2.bf16.msra.mxu0 %v643
  %713 = vmatprep.subr.bf16.mxu0 0
  %714 = vmatpush2.bf16.msra.mxu0 %v642
  %715 = vmatprep.subr.bf16.mxu0 0
  %716 = vmatpush2.bf16.msra.mxu0 %v641
  %717 = vmatprep.subr.bf16.mxu0 0
  %718 = vmatpush2.bf16.msra.mxu0 %v640
  %719 = vmatprep.subr.bf16.mxu0 0
  %720 = vmatpush2.bf16.msra.mxu0 %v639
  %721 = vmatprep.subr.bf16.mxu0 0
  %722 = vmatpush2.bf16.msra.mxu0 %v638
  %723 = vmatprep.subr.bf16.mxu0 0
  %724 = vmatpush2.bf16.msra.mxu0 %v637
  %725 = vmatprep.mubr.bf16.mxu0 %v370
  %726 = vmatmul.mubr.bf16.gmra.mxu0 %v369
  %v727 = vpop.f32.mrf.mxu0
  %v728 = vadd.f32 0.0, %v727
  %v729 = vpop.f32.mrf.mxu0
  %v730 = vpop.f32.mrf.mxu0
  %v731 = vpop.f32.mrf.mxu0
  %732 = vdwg.mxu0
  %733 = vmatprep.subr.bf16.mxu0 0
  %734 = vmatpush1.bf16.msra.mxu0 %v652
  %735 = vmatprep.subr.bf16.mxu0 0
  %736 = vmatpush1.bf16.msra.mxu0 %v651
  %737 = vmatprep.subr.bf16.mxu0 0
  %738 = vmatpush1.bf16.msra.mxu0 %v650
  %739 = vmatprep.subr.bf16.mxu0 0
  %740 = vmatpush1.bf16.msra.mxu0 %v649
  %741 = vmatprep.subr.bf16.mxu0 0
  %742 = vmatpush1.bf16.msra.mxu0 %v648
  %743 = vmatprep.subr.bf16.mxu0 0
  %744 = vmatpush1.bf16.msra.mxu0 %v647
  %745 = vmatprep.subr.bf16.mxu0 0
  %746 = vmatpush1.bf16.msra.mxu0 %v646
  %747 = vmatprep.subr.bf16.mxu0 0
  %748 = vmatpush1.bf16.msra.mxu0 %v645
  %749 = vmatprep.subr.bf16.mxu0 0
  %750 = vmatpush2.bf16.msra.mxu0 %v660
  %751 = vmatprep.subr.bf16.mxu0 0
  %752 = vmatpush2.bf16.msra.mxu0 %v659
  %753 = vmatprep.subr.bf16.mxu0 0
  %754 = vmatpush2.bf16.msra.mxu0 %v658
  %755 = vmatprep.subr.bf16.mxu0 0
  %756 = vmatpush2.bf16.msra.mxu0 %v657
  %757 = vmatprep.subr.bf16.mxu0 0
  %758 = vmatpush2.bf16.msra.mxu0 %v656
  %759 = vmatprep.subr.bf16.mxu0 0
  %760 = vmatpush2.bf16.msra.mxu0 %v655
  %761 = vmatprep.subr.bf16.mxu0 0
  %762 = vmatpush2.bf16.msra.mxu0 %v654
  %763 = vmatprep.subr.bf16.mxu0 0
  %764 = vmatpush2.bf16.msra.mxu0 %v653
  %765 = vmatprep.mubr.bf16.mxu0 %v372
  %766 = vmatmul.mubr.bf16.gmra.mxu0 %v371
  %v767 = vpop.f32.mrf.mxu0
  %v768 = vadd.f32 %v728, %v767
  %v769 = vpop.f32.mrf.mxu0
  %v770 = vpop.f32.mrf.mxu0
  %v771 = vpop.f32.mrf.mxu0
  %772 = vdwg.mxu0
  %v837 = vunpack.c.l.b16 %v373
  %v838 = vunpack.c.l.b16 %v374
  %v839 = vunpack.c.l.b16 %v375
  %v840 = vunpack.c.l.b16 %v376
  %v841 = vunpack.c.l.b16 %v377
  %v842 = vunpack.c.l.b16 %v378
  %v843 = vunpack.c.l.b16 %v379
  %v844 = vunpack.c.l.b16 %v380
  %v845 = vunpack.c.l.b16 %v381
  %v846 = vunpack.c.l.b16 %v382
  %v847 = vunpack.c.l.b16 %v383
  %v848 = vunpack.c.l.b16 %v384
  %v849 = vunpack.c.l.b16 %v385
  %v850 = vunpack.c.l.b16 %v386
  %v851 = vunpack.c.l.b16 %v387
  %v852 = vunpack.c.l.b16 %v388
  %v853 = vunpack.c.l.b16 %v389
  %v854 = vunpack.c.l.b16 %v390
  %v855 = vunpack.c.l.b16 %v391
  %v856 = vunpack.c.l.b16 %v392
  %v857 = vunpack.c.l.b16 %v393
  %v858 = vunpack.c.l.b16 %v394
  %v859 = vunpack.c.l.b16 %v395
  %v860 = vunpack.c.l.b16 %v396
  %v861 = vunpack.c.l.b16 %v397
  %v862 = vunpack.c.l.b16 %v398
  %v863 = vunpack.c.l.b16 %v399
  %v864 = vunpack.c.l.b16 %v400
  %v865 = vunpack.c.l.b16 %v401
  %v866 = vunpack.c.l.b16 %v402
  %v867 = vunpack.c.l.b16 %v403
  %v868 = vunpack.c.l.b16 %v404
  %v869 = vunpack.c.l.b16 %v405
  %v870 = vunpack.c.l.b16 %v406
  %v871 = vunpack.c.l.b16 %v407
  %v872 = vunpack.c.l.b16 %v408
  %v873 = vunpack.c.l.b16 %v409
  %v874 = vunpack.c.l.b16 %v410
  %v875 = vunpack.c.l.b16 %v411
  %v876 = vunpack.c.l.b16 %v412
  %v877 = vunpack.c.l.b16 %v413
  %v878 = vunpack.c.l.b16 %v414
  %v879 = vunpack.c.l.b16 %v415
  %v880 = vunpack.c.l.b16 %v416
  %v881 = vunpack.c.l.b16 %v417
  %v882 = vunpack.c.l.b16 %v418
  %v883 = vunpack.c.l.b16 %v419
  %v884 = vunpack.c.l.b16 %v420
  %v885 = vunpack.c.l.b16 %v421
  %v886 = vunpack.c.l.b16 %v422
  %v887 = vunpack.c.l.b16 %v423
  %v888 = vunpack.c.l.b16 %v424
  %v889 = vunpack.c.l.b16 %v425
  %v890 = vunpack.c.l.b16 %v426
  %v891 = vunpack.c.l.b16 %v427
  %v892 = vunpack.c.l.b16 %v428
  %v893 = vunpack.c.l.b16 %v429
  %v894 = vunpack.c.l.b16 %v430
  %v895 = vunpack.c.l.b16 %v431
  %v896 = vunpack.c.l.b16 %v432
  %v897 = vunpack.c.l.b16 %v433
  %v898 = vunpack.c.l.b16 %v434
  %v899 = vunpack.c.l.b16 %v435
  %v900 = vunpack.c.l.b16 %v436
  %v901 = vpack.c.b16 %v838, %v837
  %v902 = vpack.c.b16 %v840, %v839
  %v903 = vpack.c.b16 %v842, %v841
  %v904 = vpack.c.b16 %v844, %v843
  %v905 = vpack.c.b16 %v846, %v845
  %v906 = vpack.c.b16 %v848, %v847
  %v907 = vpack.c.b16 %v850, %v849
  %v908 = vpack.c.b16 %v852, %v851
  %v909 = vpack.c.b16 %v854, %v853
  %v910 = vpack.c.b16 %v856, %v855
  %v911 = vpack.c.b16 %v858, %v857
  %v912 = vpack.c.b16 %v860, %v859
  %v913 = vpack.c.b16 %v862, %v861
  %v914 = vpack.c.b16 %v864, %v863
  %v915 = vpack.c.b16 %v866, %v865
  %v916 = vpack.c.b16 %v868, %v867
  %v917 = vpack.c.b16 %v870, %v869
  %v918 = vpack.c.b16 %v872, %v871
  %v919 = vpack.c.b16 %v874, %v873
  %v920 = vpack.c.b16 %v876, %v875
  %v921 = vpack.c.b16 %v878, %v877
  %v922 = vpack.c.b16 %v880, %v879
  %v923 = vpack.c.b16 %v882, %v881
  %v924 = vpack.c.b16 %v884, %v883
  %v925 = vpack.c.b16 %v886, %v885
  %v926 = vpack.c.b16 %v888, %v887
  %v927 = vpack.c.b16 %v890, %v889
  %v928 = vpack.c.b16 %v892, %v891
  %v929 = vpack.c.b16 %v894, %v893
  %v930 = vpack.c.b16 %v896, %v895
  %v931 = vpack.c.b16 %v898, %v897
  %v932 = vpack.c.b16 %v900, %v899
  %965 = vmatprep.subr.bf16.mxu0 0
  %966 = vmatpush1.bf16.msra.mxu0 %v908
  %967 = vmatprep.subr.bf16.mxu0 0
  %968 = vmatpush1.bf16.msra.mxu0 %v907
  %969 = vmatprep.subr.bf16.mxu0 0
  %970 = vmatpush1.bf16.msra.mxu0 %v906
  %971 = vmatprep.subr.bf16.mxu0 0
  %972 = vmatpush1.bf16.msra.mxu0 %v905
  %973 = vmatprep.subr.bf16.mxu0 0
  %974 = vmatpush1.bf16.msra.mxu0 %v904
  %975 = vmatprep.subr.bf16.mxu0 0
  %976 = vmatpush1.bf16.msra.mxu0 %v903
  %977 = vmatprep.subr.bf16.mxu0 0
  %978 = vmatpush1.bf16.msra.mxu0 %v902
  %979 = vmatprep.subr.bf16.mxu0 0
  %980 = vmatpush1.bf16.msra.mxu0 %v901
  %981 = vmatprep.subr.bf16.mxu0 0
  %982 = vmatpush2.bf16.msra.mxu0 %v916
  %983 = vmatprep.subr.bf16.mxu0 0
  %984 = vmatpush2.bf16.msra.mxu0 %v915
  %985 = vmatprep.subr.bf16.mxu0 0
  %986 = vmatpush2.bf16.msra.mxu0 %v914
  %987 = vmatprep.subr.bf16.mxu0 0
  %988 = vmatpush2.bf16.msra.mxu0 %v913
  %989 = vmatprep.subr.bf16.mxu0 0
  %990 = vmatpush2.bf16.msra.mxu0 %v912
  %991 = vmatprep.subr.bf16.mxu0 0
  %992 = vmatpush2.bf16.msra.mxu0 %v911
  %993 = vmatprep.subr.bf16.mxu0 0
  %994 = vmatpush2.bf16.msra.mxu0 %v910
  %995 = vmatprep.subr.bf16.mxu0 0
  %996 = vmatpush2.bf16.msra.mxu0 %v909
  %997 = vmatprep.mubr.bf16.mxu0 %v362
  %998 = vmatmul.mubr.bf16.gmra.mxu0 %v361
  %v999 = vpop.f32.mrf.mxu0
  %v1000 = vadd.f32 %v768, %v999
  %v1001 = vpop.f32.mrf.mxu0
  %v1002 = vpop.f32.mrf.mxu0
  %v1003 = vpop.f32.mrf.mxu0
  %1004 = vdwg.mxu0
  %1005 = vmatprep.subr.bf16.mxu0 0
  %1006 = vmatpush1.bf16.msra.mxu0 %v924
  %1007 = vmatprep.subr.bf16.mxu0 0
  %1008 = vmatpush1.bf16.msra.mxu0 %v923
  %1009 = vmatprep.subr.bf16.mxu0 0
  %1010 = vmatpush1.bf16.msra.mxu0 %v922
  %1011 = vmatprep.subr.bf16.mxu0 0
  %1012 = vmatpush1.bf16.msra.mxu0 %v921
  %1013 = vmatprep.subr.bf16.mxu0 0
  %1014 = vmatpush1.bf16.msra.mxu0 %v920
  %1015 = vmatprep.subr.bf16.mxu0 0
  %1016 = vmatpush1.bf16.msra.mxu0 %v919
  %1017 = vmatprep.subr.bf16.mxu0 0
  %1018 = vmatpush1.bf16.msra.mxu0 %v918
  %1019 = vmatprep.subr.bf16.mxu0 0
  %1020 = vmatpush1.bf16.msra.mxu0 %v917
  %1021 = vmatprep.subr.bf16.mxu0 0
  %1022 = vmatpush2.bf16.msra.mxu0 %v932
  %1023 = vmatprep.subr.bf16.mxu0 0
  %1024 = vmatpush2.bf16.msra.mxu0 %v931
  %1025 = vmatprep.subr.bf16.mxu0 0
  %1026 = vmatpush2.bf16.msra.mxu0 %v930
  %1027 = vmatprep.subr.bf16.mxu0 0
  %1028 = vmatpush2.bf16.msra.mxu0 %v929
  %1029 = vmatprep.subr.bf16.mxu0 0
  %1030 = vmatpush2.bf16.msra.mxu0 %v928
  %1031 = vmatprep.subr.bf16.mxu0 0
  %1032 = vmatpush2.bf16.msra.mxu0 %v927
  %1033 = vmatprep.subr.bf16.mxu0 0
  %1034 = vmatpush2.bf16.msra.mxu0 %v926
  %1035 = vmatprep.subr.bf16.mxu0 0
  %1036 = vmatpush2.bf16.msra.mxu0 %v925
  %1037 = vmatprep.mubr.bf16.mxu0 %v364
  %1038 = vmatmul.mubr.bf16.gmra.mxu0 %v363
  %v1039 = vpop.f32.mrf.mxu0
  %v1040 = vadd.f32 %v1000, %v1039
  %v1041 = vpop.f32.mrf.mxu0
  %v1042 = vpop.f32.mrf.mxu0
  %v1043 = vpop.f32.mrf.mxu0
  %1044 = vdwg.mxu0
  %v1045 = vld [vmem:[%s9] sm:$0x1]
  %v1047 = vlaneseq
  %v1048 = vshrl.u32 %v1047, 7
  %v1049 = vsub.s32 0, %v1048
  %v1050 = vrot.slane %v1045, %v1049
  %v1052 = vadd.f32 %v1040, %v1050
  %vm1053 = vcmask 31744
  %v1054 = vsel %vm1053, %v1052, -inf
  %1055 = vmax.xlane.f32.xlu0 %v1054
  %v1056 = vpop.xlane.xlu0 %1055
  %v1057 = vsub.f32 %v1052, %v1056
  %v1058 = vmul.f32 %v1057, 1.442695
  %v1059 = vpow.pop %v1058
  %v1060 = vsel %vm1053, %v1059, 0.0
  %1061 = vadd.xlane.f32.xlu0 %v1060
  %v1062 = vpop.xlane.xlu0 %1061
  %v1063 = vrcp.pop %v1062
  %v1064 = vmul.f32 %v1059, %v1063
  %v1065 = vld [vmem:[%s10] sm:$0xff]
  %v1067 = vcombine.high %v1065, %v1065
  %v1069 = vsel %vm1053, %v1064, 0
  %vm1071 = vcmask 1043456
  %v1072 = vsel %vm1071, %v1065, 0
  %v1074 = vsel %vm1071, %v1067, 0
  %1076 = vmatprep.subr.mxu0 0.0
  %1077 = vmatpush1.msra.mxu0 0.0
  %1078 = vmatprep.subr.mxu0 0.0
  %1079 = vmatpush1.msra.mxu0 0.0
  %1080 = vmatprep.subr.mxu0 0.0
  %1081 = vmatpush1.msra.mxu0 0.0
  %1082 = vmatprep.subr.mxu0 0.0
  %1083 = vmatpush1.msra.mxu0 0.0
  %1084 = vmatprep.subr.mxu0 0.0
  %1085 = vmatpush1.msra.mxu0 0.0
  %1086 = vmatprep.subr.mxu0 0.0
  %1087 = vmatpush1.msra.mxu0 0.0
  %1088 = vmatprep.subr.mxu0 0.0
  %1089 = vmatpush1.msra.mxu0 0.0
  %1090 = vmatprep.subr.mxu0 0.0
  %1091 = vmatpush1.msra.mxu0 0.0
  %1092 = vmatprep.subr.mxu0 0.0
  %1093 = vmatpush1.msra.mxu0 0.0
  %1094 = vmatprep.subr.mxu0 0.0
  %1095 = vmatpush1.msra.mxu0 0.0
  %1096 = vmatprep.subr.mxu0 0.0
  %1097 = vmatpush1.msra.mxu0 0.0
  %1098 = vmatprep.subr.mxu0 0.0
  %1099 = vmatpush1.msra.mxu0 0.0
  %1100 = vmatprep.subr.mxu0 0.0
  %1101 = vmatpush1.msra.mxu0 0.0
  %1102 = vmatprep.subr.mxu0 0.0
  %1103 = vmatpush1.msra.mxu0 0.0
  %1104 = vmatprep.subr.mxu0 0.0
  %1105 = vmatpush1.msra.mxu0 0.0
  %1106 = vmatprep.subr.mxu0 %v1074
  %1107 = vmatpush1.msra.mxu0 %v1072
  %1108 = vmatprep.subr.mxu0 0.0
  %1109 = vmatpush2.msra.mxu0 0.0
  %1110 = vmatprep.subr.mxu0 0.0
  %1111 = vmatpush2.msra.mxu0 0.0
  %1112 = vmatprep.subr.mxu0 0.0
  %1113 = vmatpush2.msra.mxu0 0.0
  %1114 = vmatprep.subr.mxu0 0.0
  %1115 = vmatpush2.msra.mxu0 0.0
  %1116 = vmatprep.subr.mxu0 0.0
  %1117 = vmatpush2.msra.mxu0 0.0
  %1118 = vmatprep.subr.mxu0 0.0
  %1119 = vmatpush2.msra.mxu0 0.0
  %1120 = vmatprep.subr.mxu0 0.0
  %1121 = vmatpush2.msra.mxu0 0.0
  %1122 = vmatprep.subr.mxu0 0.0
  %1123 = vmatpush2.msra.mxu0 0.0
  %1124 = vmatprep.subr.mxu0 0.0
  %1125 = vmatpush2.msra.mxu0 0.0
  %1126 = vmatprep.subr.mxu0 0.0
  %1127 = vmatpush2.msra.mxu0 0.0
  %1128 = vmatprep.subr.mxu0 0.0
  %1129 = vmatpush2.msra.mxu0 0.0
  %1130 = vmatprep.subr.mxu0 0.0
  %1131 = vmatpush2.msra.mxu0 0.0
  %1132 = vmatprep.subr.mxu0 0.0
  %1133 = vmatpush2.msra.mxu0 0.0
  %1134 = vmatprep.subr.mxu0 0.0
  %1135 = vmatpush2.msra.mxu0 0.0
  %1136 = vmatprep.subr.mxu0 0.0
  %1137 = vmatpush2.msra.mxu0 0.0
  %1138 = vmatprep.subr.mxu0 0.0
  %1139 = vmatpush2.msra.mxu0 0.0
  %1140 = vmatprep.mubr.f32.mxu0 0.0
  %1141 = vmatmul.mubr.f32.gmra.mxu0 %v1069
  %v1142 = vpop.f32.mrf.mxu0
  %v1143 = vadd.f32 0.0, %v1142
  %v1144 = vpop.f32.mrf.mxu0
  %v1145 = vadd.f32 0.0, %v1144
  %1146 = vdwg.mxu0
  %v1147 = vadd.f32 %v155, %v310
  %v1148 = vadd.f32 %v157, %v312
  %v1149 = vadd.f32 %v196, %v351
  %v1150 = vadd.f32 %v198, %v353
  %v1151 = vmul.f32 %v1147, 0.5
  %v1152 = vtanh.pop %v1151
  %v1153 = vmul.f32 %v1152, 0.5
  %v1154 = vadd.f32 %v1153, 0.5
  %v1155 = vmul.f32 %v1148, 0.5
  %v1156 = vtanh.pop %v1155
  %v1157 = vmul.f32 %v1156, 0.5
  %v1158 = vadd.f32 %v1157, 0.5
  %v1159 = vmul.f32 %v1149, 0.5
  %v1160 = vtanh.pop %v1159
  %v1161 = vmul.f32 %v1160, 0.5
  %v1162 = vadd.f32 %v1161, 0.5
  %v1163 = vtanh.pop %v1150
  %v1164 = vld [vmem:[%s2] sm:$0xff]
  %v1165 = vld [vmem:[%s11] sm:$0xff]
  %v1166 = vld [vmem:[%s11 + $0x8] sm:$0xff]
  %v1167 = vld [vmem:[%s11 + $0x10] sm:$0xff]
  %v1168 = vld [vmem:[%s11 + $0x18] sm:$0xff]
  %v1170 = vsel %vm116, %v1164, 0
  %1172 = vmatprep.subr.mxu0 0.0
  %1173 = vmatpush1.msra.mxu0 0.0
  %1174 = vmatprep.subr.mxu0 0.0
  %1175 = vmatpush1.msra.mxu0 0.0
  %1176 = vmatprep.subr.mxu0 0.0
  %1177 = vmatpush1.msra.mxu0 0.0
  %1178 = vmatprep.subr.mxu0 0.0
  %1179 = vmatpush1.msra.mxu0 0.0
  %1180 = vmatprep.subr.mxu0 0.0
  %1181 = vmatpush1.msra.mxu0 0.0
  %1182 = vmatprep.subr.mxu0 0.0
  %1183 = vmatpush1.msra.mxu0 0.0
  %1184 = vmatprep.subr.mxu0 0.0
  %1185 = vmatpush1.msra.mxu0 0.0
  %1186 = vmatprep.subr.mxu0 0.0
  %1187 = vmatpush1.msra.mxu0 0.0
  %1188 = vmatprep.subr.mxu0 0.0
  %1189 = vmatpush1.msra.mxu0 0.0
  %1190 = vmatprep.subr.mxu0 0.0
  %1191 = vmatpush1.msra.mxu0 0.0
  %1192 = vmatprep.subr.mxu0 0.0
  %1193 = vmatpush1.msra.mxu0 0.0
  %1194 = vmatprep.subr.mxu0 0.0
  %1195 = vmatpush1.msra.mxu0 0.0
  %1196 = vmatprep.subr.mxu0 0.0
  %1197 = vmatpush1.msra.mxu0 %v1168
  %1198 = vmatprep.subr.mxu0 0.0
  %1199 = vmatpush1.msra.mxu0 %v1167
  %1200 = vmatprep.subr.mxu0 0.0
  %1201 = vmatpush1.msra.mxu0 %v1166
  %1202 = vmatprep.subr.mxu0 0.0
  %1203 = vmatpush1.msra.mxu0 %v1165
  %1204 = vmatprep.subr.mxu0 0.0
  %1205 = vmatpush2.msra.mxu0 0.0
  %1206 = vmatprep.subr.mxu0 0.0
  %1207 = vmatpush2.msra.mxu0 0.0
  %1208 = vmatprep.subr.mxu0 0.0
  %1209 = vmatpush2.msra.mxu0 0.0
  %1210 = vmatprep.subr.mxu0 0.0
  %1211 = vmatpush2.msra.mxu0 0.0
  %1212 = vmatprep.subr.mxu0 0.0
  %1213 = vmatpush2.msra.mxu0 0.0
  %1214 = vmatprep.subr.mxu0 0.0
  %1215 = vmatpush2.msra.mxu0 0.0
  %1216 = vmatprep.subr.mxu0 0.0
  %1217 = vmatpush2.msra.mxu0 0.0
  %1218 = vmatprep.subr.mxu0 0.0
  %1219 = vmatpush2.msra.mxu0 0.0
  %1220 = vmatprep.subr.mxu0 0.0
  %1221 = vmatpush2.msra.mxu0 0.0
  %1222 = vmatprep.subr.mxu0 0.0
  %1223 = vmatpush2.msra.mxu0 0.0
  %1224 = vmatprep.subr.mxu0 0.0
  %1225 = vmatpush2.msra.mxu0 0.0
  %1226 = vmatprep.subr.mxu0 0.0
  %1227 = vmatpush2.msra.mxu0 0.0
  %1228 = vmatprep.subr.mxu0 0.0
  %1229 = vmatpush2.msra.mxu0 0.0
  %1230 = vmatprep.subr.mxu0 0.0
  %1231 = vmatpush2.msra.mxu0 0.0
  %1232 = vmatprep.subr.mxu0 0.0
  %1233 = vmatpush2.msra.mxu0 0.0
  %1234 = vmatprep.subr.mxu0 0.0
  %1235 = vmatpush2.msra.mxu0 0.0
  %1236 = vmatprep.mubr.f32.mxu0 0.0
  %1237 = vmatmul.mubr.f32.gmra.mxu0 %v1170
  %v1238 = vpop.f32.mrf.mxu0
  %v1239 = vadd.f32 0.0, %v1238
  %v1240 = vpop.f32.mrf.mxu0
  %1241 = vdwg.mxu0
  %v1242 = vmul.f32 %v1239, %v1158
  %v1243 = vmul.f32 %v1154, %v1163
  %v1244 = vadd.f32 %v1242, %v1243
  %v1245 = vtanh.pop %v1244
  %v1246 = vmul.f32 %v1162, %v1245
  %v1247 = vmul.f32 %v1246, %v1143
  %v1248 = vmul.f32 %v1244, %v1143
  %1250 = vrot.lane.b32.xlu0 %v1247, 96
  %v1251 = vpop.permute.xlu0 %1250
  %v1253 = vadd.f32 %v1247, %v1251
  %1254 = vrot.lane.b32.xlu0 %v1247, 64
  %v1255 = vpop.permute.xlu0 %1254
  %v1257 = vadd.f32 %v1253, %v1255
  %1258 = vrot.lane.b32.xlu0 %v1247, 32
  %v1259 = vpop.permute.xlu0 %1258
  %v1261 = vadd.f32 %v1257, %v1259
  %1263 = vrot.lane.b32.xlu0 %v1248, 96
  %v1264 = vpop.permute.xlu0 %1263
  %v1266 = vadd.f32 %v1248, %v1264
  %1267 = vrot.lane.b32.xlu0 %v1248, 64
  %v1268 = vpop.permute.xlu0 %1267
  %v1270 = vadd.f32 %v1266, %v1268
  %1271 = vrot.lane.b32.xlu0 %v1248, 32
  %v1272 = vpop.permute.xlu0 %1271
  %v1274 = vadd.f32 %v1270, %v1272
  %v1276 = vsel %vm116, %v1261, 0
  %1278 = vmatprep.subr.mxu0 0.0
  %1279 = vmatpush1.msra.mxu0 0.0
  %1280 = vmatprep.subr.mxu0 0.0
  %1281 = vmatpush1.msra.mxu0 0.0
  %1282 = vmatprep.subr.mxu0 0.0
  %1283 = vmatpush1.msra.mxu0 0.0
  %1284 = vmatprep.subr.mxu0 0.0
  %1285 = vmatpush1.msra.mxu0 0.0
  %1286 = vmatprep.subr.mxu0 0.0
  %1287 = vmatpush1.msra.mxu0 0.0
  %1288 = vmatprep.subr.mxu0 0.0
  %1289 = vmatpush1.msra.mxu0 0.0
  %1290 = vmatprep.subr.mxu0 0.0
  %1291 = vmatpush1.msra.mxu0 0.0
  %1292 = vmatprep.subr.mxu0 0.0
  %1293 = vmatpush1.msra.mxu0 0.0
  %1294 = vmatprep.subr.mxu0 0.0
  %1295 = vmatpush1.msra.mxu0 0.0
  %1296 = vmatprep.subr.mxu0 0.0
  %1297 = vmatpush1.msra.mxu0 0.0
  %1298 = vmatprep.subr.mxu0 0.0
  %1299 = vmatpush1.msra.mxu0 0.0
  %1300 = vmatprep.subr.mxu0 0.0
  %1301 = vmatpush1.msra.mxu0 0.0
  %1302 = vmatprep.subr.mxu0 0.0
  %1303 = vmatpush1.msra.mxu0 %v1168
  %1304 = vmatprep.subr.mxu0 0.0
  %1305 = vmatpush1.msra.mxu0 %v1167
  %1306 = vmatprep.subr.mxu0 0.0
  %1307 = vmatpush1.msra.mxu0 %v1166
  %1308 = vmatprep.subr.mxu0 0.0
  %1309 = vmatpush1.msra.mxu0 %v1165
  %1310 = vmatprep.subr.mxu0 0.0
  %1311 = vmatpush2.msra.mxu0 0.0
  %1312 = vmatprep.subr.mxu0 0.0
  %1313 = vmatpush2.msra.mxu0 0.0
  %1314 = vmatprep.subr.mxu0 0.0
  %1315 = vmatpush2.msra.mxu0 0.0
  %1316 = vmatprep.subr.mxu0 0.0
  %1317 = vmatpush2.msra.mxu0 0.0
  %1318 = vmatprep.subr.mxu0 0.0
  %1319 = vmatpush2.msra.mxu0 0.0
  %1320 = vmatprep.subr.mxu0 0.0
  %1321 = vmatpush2.msra.mxu0 0.0
  %1322 = vmatprep.subr.mxu0 0.0
  %1323 = vmatpush2.msra.mxu0 0.0
  %1324 = vmatprep.subr.mxu0 0.0
  %1325 = vmatpush2.msra.mxu0 0.0
  %1326 = vmatprep.subr.mxu0 0.0
  %1327 = vmatpush2.msra.mxu0 0.0
  %1328 = vmatprep.subr.mxu0 0.0
  %1329 = vmatpush2.msra.mxu0 0.0
  %1330 = vmatprep.subr.mxu0 0.0
  %1331 = vmatpush2.msra.mxu0 0.0
  %1332 = vmatprep.subr.mxu0 0.0
  %1333 = vmatpush2.msra.mxu0 0.0
  %1334 = vmatprep.subr.mxu0 0.0
  %1335 = vmatpush2.msra.mxu0 0.0
  %1336 = vmatprep.subr.mxu0 0.0
  %1337 = vmatpush2.msra.mxu0 0.0
  %1338 = vmatprep.subr.mxu0 0.0
  %1339 = vmatpush2.msra.mxu0 0.0
  %1340 = vmatprep.subr.mxu0 0.0
  %1341 = vmatpush2.msra.mxu0 0.0
  %1342 = vmatprep.mubr.f32.mxu0 0.0
  %1343 = vmatmul.mubr.f32.gmra.mxu0 %v1276
  %v1344 = vpop.f32.mrf.mxu0
  %v1345 = vadd.f32 0.0, %v1344
  %v1346 = vpop.f32.mrf.mxu0
  %1347 = vdwg.mxu0
  %v1349 = vsel %vm116, %v1274, 0
  %1351 = vmatprep.subr.mxu0 0.0
  %1352 = vmatpush1.msra.mxu0 0.0
  %1353 = vmatprep.subr.mxu0 0.0
  %1354 = vmatpush1.msra.mxu0 0.0
  %1355 = vmatprep.subr.mxu0 0.0
  %1356 = vmatpush1.msra.mxu0 0.0
  %1357 = vmatprep.subr.mxu0 0.0
  %1358 = vmatpush1.msra.mxu0 0.0
  %1359 = vmatprep.subr.mxu0 0.0
  %1360 = vmatpush1.msra.mxu0 0.0
  %1361 = vmatprep.subr.mxu0 0.0
  %1362 = vmatpush1.msra.mxu0 0.0
  %1363 = vmatprep.subr.mxu0 0.0
  %1364 = vmatpush1.msra.mxu0 0.0
  %1365 = vmatprep.subr.mxu0 0.0
  %1366 = vmatpush1.msra.mxu0 0.0
  %1367 = vmatprep.subr.mxu0 0.0
  %1368 = vmatpush1.msra.mxu0 0.0
  %1369 = vmatprep.subr.mxu0 0.0
  %1370 = vmatpush1.msra.mxu0 0.0
  %1371 = vmatprep.subr.mxu0 0.0
  %1372 = vmatpush1.msra.mxu0 0.0
  %1373 = vmatprep.subr.mxu0 0.0
  %1374 = vmatpush1.msra.mxu0 0.0
  %1375 = vmatprep.subr.mxu0 0.0
  %1376 = vmatpush1.msra.mxu0 %v1168
  %1377 = vmatprep.subr.mxu0 0.0
  %1378 = vmatpush1.msra.mxu0 %v1167
  %1379 = vmatprep.subr.mxu0 0.0
  %1380 = vmatpush1.msra.mxu0 %v1166
  %1381 = vmatprep.subr.mxu0 0.0
  %1382 = vmatpush1.msra.mxu0 %v1165
  %1383 = vmatprep.subr.mxu0 0.0
  %1384 = vmatpush2.msra.mxu0 0.0
  %1385 = vmatprep.subr.mxu0 0.0
  %1386 = vmatpush2.msra.mxu0 0.0
  %1387 = vmatprep.subr.mxu0 0.0
  %1388 = vmatpush2.msra.mxu0 0.0
  %1389 = vmatprep.subr.mxu0 0.0
  %1390 = vmatpush2.msra.mxu0 0.0
  %1391 = vmatprep.subr.mxu0 0.0
  %1392 = vmatpush2.msra.mxu0 0.0
  %1393 = vmatprep.subr.mxu0 0.0
  %1394 = vmatpush2.msra.mxu0 0.0
  %1395 = vmatprep.subr.mxu0 0.0
  %1396 = vmatpush2.msra.mxu0 0.0
  %1397 = vmatprep.subr.mxu0 0.0
  %1398 = vmatpush2.msra.mxu0 0.0
  %1399 = vmatprep.subr.mxu0 0.0
  %1400 = vmatpush2.msra.mxu0 0.0
  %1401 = vmatprep.subr.mxu0 0.0
  %1402 = vmatpush2.msra.mxu0 0.0
  %1403 = vmatprep.subr.mxu0 0.0
  %1404 = vmatpush2.msra.mxu0 0.0
  %1405 = vmatprep.subr.mxu0 0.0
  %1406 = vmatpush2.msra.mxu0 0.0
  %1407 = vmatprep.subr.mxu0 0.0
  %1408 = vmatpush2.msra.mxu0 0.0
  %1409 = vmatprep.subr.mxu0 0.0
  %1410 = vmatpush2.msra.mxu0 0.0
  %1411 = vmatprep.subr.mxu0 0.0
  %1412 = vmatpush2.msra.mxu0 0.0
  %1413 = vmatprep.subr.mxu0 0.0
  %1414 = vmatpush2.msra.mxu0 0.0
  %1415 = vmatprep.mubr.f32.mxu0 0.0
  %1416 = vmatmul.mubr.f32.gmra.mxu0 %v1349
  %v1417 = vpop.f32.mrf.mxu0
  %v1418 = vadd.f32 0.0, %v1417
  %v1419 = vpop.f32.mrf.mxu0
  %1420 = vdwg.mxu0
  %v1421 = vlaneseq
  %v1422 = vand.u32 %v1421, 127
  %vm1423 = vcmp.lt.s32.totalorder %v1422, 32
  %vm1424 = vcmp.lt.s32.totalorder %v1422, 64
  %v1425 = vsel %vm1424, %v1418, %v1145
  %v1426 = vsel %vm1423, %v1345, %v1425
  %1427 = vst [vmem:[%s12] sm:$0xff] %v1426
  // Predicated region
  $region50: #{group_lstm_cell.1} parent=0 // pred_check
    _
  $region51: #{group_lstm_cell.1} parent=0 // pred_check_branch
    %1429 = sbr.rel (0) target = $region53
  $region52: #{group_lstm_cell.1} parent=0 // pred_region
    _
  $region53: #{group_lstm_cell.1} parent=0 // pred_fallthru
    _
  // Predicated region
  $region54: #{group_lstm_cell.1} parent=0 // pred_check
    _
  $region55: #{group_lstm_cell.1} parent=0 // pred_check_branch
    %1431 = sbr.rel (0) target = $region57
  $region56: #{group_lstm_cell.1} parent=0 // pred_region
    _
  $region57: #{group_lstm_cell.1} parent=0 // pred_fallthru
    _

</llo_original>
